<compile_context>
chip_gen: v5e
topology: v5e:2x2
jax: 0.10.0
libtpu: 0.0.40
codegen_flags: <defaults>
</compile_context>

<pallas_src>
import functools
import math

import jax
import jax.numpy as jnp
from jax.experimental import pallas as pl
from jax.experimental.pallas import tpu as pltpu


# -----------------------------------------------------------------------------
# Padding / repacking helpers (run in the wrapper, outside the kernel).
# -----------------------------------------------------------------------------
def _round_up(x, m):
    return ((x + m - 1) // m) * m


def _largest_divisor_leq(n, cap):
    d = min(n, cap)
    while n % d:
        d -= 1
    return d


def _pack_gate_weight(w, in_dim_p, h_p, dtype):
    """PyTorch packed (3H, in_dim) -> gate-padded (in_dim_p, 3*h_p) in `dtype`.

    Each gate's H columns are zero-padded to h_p so the r/z/n slabs start on
    128-lane boundaries inside the kernel."""
    three_h, in_dim = w.shape
    h = three_h // 3
    w = w.reshape(3, h, in_dim).astype(jnp.float32)
    w = jnp.pad(w, ((0, 0), (0, h_p - h), (0, in_dim_p - in_dim)))
    return jnp.transpose(w, (2, 0, 1)).reshape(in_dim_p, 3 * h_p).astype(dtype)


def _pack_gate_bias(b, h_p):
    h = b.shape[0] // 3
    b = b.reshape(3, h).astype(jnp.float32)
    b = jnp.pad(b, ((0, 0), (0, h_p - h)))
    return b.reshape(1, 3 * h_p)


# -----------------------------------------------------------------------------
# Kernel: one grid step per GRU layer; final Linear fused into the last step.
# Ref order: x(HBM), W_ih[l], W_hh[l], gi_bias[l], b_hn[l], W_out, b_out,
#            logits_out, seq_scratch, gi_scratch, h_all_scratch, dma_sem.
# -----------------------------------------------------------------------------
def _make_gru_kernel(n_layers, seq_len, t_chunk, b_p, h_p, d_p):
    n_chunks = seq_len // t_chunk
    unroll = min(t_chunk, 8)   # bounded unroll: LLO visibility w/o vreg blowup

    def kernel(x_hbm_ref, wih_ref, whh_ref, gib_ref, bhn_ref,
               wout_ref, bout_ref, logit_ref,
               seq_ref, gi_ref, hall_ref, dma_sem):
        layer = pl.program_id(0)
        is_last_layer = layer == n_layers - 1
        not_last_layer = layer < n_layers - 1

        # Layer 0 input = x: DMA it HBM -> seq scratch once. Later layers
        # reuse seq_ref in place (a layer overwrites its own input only after
        # the chunk's hoisted projection has consumed it).
        @pl.when(layer == 0)
        def _():
            cp = pltpu.make_async_copy(x_hbm_ref, seq_ref, dma_sem)
            cp.start()
            cp.wait()

        wih = wih_ref[...]                 # (d_p, 3*h_p)  bf16
        whh = whh_ref[...]                 # (h_p, 3*h_p)  bf16
        gi_bias = gib_ref[...]             # (1, 3*h_p)    f32: b_ih + [b_hr,b_hz,0]
        # Hoist the b_hn broadcast out of the unrolled time loop (JAX does
        # not CSE broadcast_in_dim per unrolled step).
        bhn = jnp.broadcast_to(bhn_ref[...], (b_p, h_p))   # f32

        def chunk_body(c, h_carry):
            base = pl.multiple_of(c * (t_chunk * b_p), 8)
            chunk_in = seq_ref[pl.ds(base, t_chunk * b_p), :]      # (T_c*B_p, d_p)
            # Hoisted input projection for the whole chunk: ONE MXU call,
            # bf16 operands, f32 accumulation.
            gi_ref[...] = (
                jnp.dot(chunk_in.astype(jnp.bfloat16), wih,
                        preferred_element_type=jnp.float32)
                + gi_bias)

            def step(t, h_prev):
                row = pl.multiple_of(t * b_p, 8)
                gi_t = gi_ref[pl.ds(row, b_p), :]                  # (B_p, 3*h_p) f32
                gh = jnp.dot(h_prev.astype(jnp.bfloat16), whh,
                             preferred_element_type=jnp.float32)   # (B_p, 3*h_p) f32
                # Gate slabs are 128-lane aligned (h_p % 128 == 0): free views.
                r = jax.nn.sigmoid(gi_t[:, :h_p] + gh[:, :h_p])
                z = jax.nn.sigmoid(gi_t[:, h_p:2 * h_p] + gh[:, h_p:2 * h_p])
                n = jnp.tanh(gi_t[:, 2 * h_p:] + r * (gh[:, 2 * h_p:] + bhn))
                h_new = (1.0 - z) * n + z * h_prev

                # Feed the next layer; dead work on the last layer -> skip.
                @pl.when(not_last_layer)
                def _():
                    abs_row = pl.multiple_of(base + t * b_p, 8)
                    seq_ref[pl.ds(abs_row, b_p), :h_p] = h_new
                return h_new

            return jax.lax.fori_loop(0, t_chunk, step, h_carry, unroll=unroll)

        h0 = jnp.zeros((b_p, h_p), jnp.float32)
        h_last = jax.lax.fori_loop(0, n_chunks, chunk_body, h0)

        # Stash this layer's final hidden state into the stacked h_n slab
        # (lane-dense, bounds vreg live ranges across grid steps).
        hall_ref[pl.ds(pl.multiple_of(layer * b_p, 8), b_p), :] = h_last

        # Fused Linear(H -> n_classes) on h_n.view(-1, H), last layer only.
        @pl.when(is_last_layer)
        def _():
            logit_ref[...] = (
                jnp.dot(hall_ref[...].astype(jnp.bfloat16), wout_ref[...],
                        preferred_element_type=jnp.float32)
                + bout_ref[...])

    return kernel


# -----------------------------------------------------------------------------
# Forward wrapper: pad/repack params, call the fused kernel, slice off padding.
# -----------------------------------------------------------------------------
def basic_gru_forward(x, params, *, n_layers, hidden_dim, n_classes):
    """x: (B, T, E) batch_first (PyTorch). Returns (n_layers*B, n_classes)."""
    B, T, E = x.shape
    H, C = hidden_dim, n_classes
    B_p = _round_up(B, 8)        # sublanes
    E_p = _round_up(E, 128)      # lanes
    H_p = _round_up(H, 128)
    C_p = _round_up(C, 128)
    D_p = max(E_p, H_p)          # common input width for all layers
    t_chunk = _largest_divisor_leq(T, 64)
    n_chunks = T // t_chunk

    # time-major, (8,128)-padded, flattened to (T*B_p, D_p), f32 (cast to bf16
    # at the MXU inside the kernel).
    x_t = jnp.transpose(x, (1, 0, 2)).astype(jnp.float32)
    x_p = jnp.pad(x_t, ((0, 0), (0, B_p - B), (0, D_p - E))).reshape(T * B_p, D_p)

    # Stack per-layer weights so a layer grid axis can double-buffer them.
    wih_stack = jnp.stack([_pack_gate_weight(wih, D_p, H_p, jnp.bfloat16)
                           for (wih, _, _, _) in params["gru"]])
    whh_stack = jnp.stack([_pack_gate_weight(whh, H_p, H_p, jnp.bfloat16)
                           for (_, whh, _, _) in params["gru"]])
    gib_list, bhn_list = [], []
    for (_, _, bih, bhh) in params["gru"]:
        bih_p = _pack_gate_bias(bih, H_p)
        bhh_p = _pack_gate_bias(bhh, H_p)
        # Fold b_hr/b_hz into the hoisted projection bias; b_hn must stay
        # inside the r*(...) term (PyTorch GRU definition).
        gib_list.append(bih_p.at[:, :2 * H_p].add(bhh_p[:, :2 * H_p]))
        bhn_list.append(bhh_p[:, 2 * H_p:])
    gib_stack = jnp.stack(gib_list)          # (n_layers, 1, 3*H_p) f32
    bhn_stack = jnp.stack(bhn_list)          # (n_layers, 1, H_p)   f32

    w_out_p = jnp.pad(params["out_w"].T.astype(jnp.float32),
                      ((0, H_p - H), (0, C_p - C))).astype(jnp.bfloat16)
    b_out_p = jnp.pad(params["out_b"].astype(jnp.float32),
                      (0, C_p - C)).reshape(1, C_p)

    in_specs = [
        pl.BlockSpec(memory_space=pl.ANY),                         # x stays in HBM
        pl.BlockSpec((None, D_p, 3 * H_p), lambda l: (l, 0, 0)),   # W_ih[layer]
        pl.BlockSpec((None, H_p, 3 * H_p), lambda l: (l, 0, 0)),   # W_hh[layer]
        pl.BlockSpec((None, 1, 3 * H_p), lambda l: (l, 0, 0)),     # gi bias[layer]
        pl.BlockSpec((None, 1, H_p), lambda l: (l, 0, 0)),         # b_hn[layer]
        pl.BlockSpec((H_p, C_p), lambda l: (0, 0)),                # W_out
        pl.BlockSpec((1, C_p), lambda l: (0, 0)),                  # b_out
    ]

    # Deliberate VMEM budget (double-buffered per-layer weights + scratch + head).
    weight_bytes = 2 * ((D_p * 3 * H_p + H_p * 3 * H_p) * 2        # bf16 weights
                        + (3 * H_p + H_p) * 4)                     # f32 biases
    scratch_bytes = (T * B_p * D_p + t_chunk * B_p * 3 * H_p
                     + n_layers * B_p * H_p) * 4
    head_bytes = H_p * C_p * 2 + C_p * 4 + n_layers * B_p * C_p * 4
    vmem_limit = int(min(max(2 * (weight_bytes + scratch_bytes + head_bytes),
                             8 << 20), 48 << 20))

    kernel = _make_gru_kernel(n_layers, T, t_chunk, B_p, H_p, D_p)
    logits_p = pl.pallas_call(
        kernel,
        grid_spec=pltpu.PrefetchScalarGridSpec(
            num_scalar_prefetch=0,
            grid=(n_layers,),
            in_specs=in_specs,
            out_specs=pl.BlockSpec((n_layers * B_p, C_p), lambda l: (0, 0)),
            scratch_shapes=[
                pltpu.VMEM((T * B_p, D_p), jnp.float32),           # layer in/out ping-pong
                pltpu.VMEM((t_chunk * B_p, 3 * H_p), jnp.float32),  # hoisted gi (per chunk)
                pltpu.VMEM((n_layers * B_p, H_p), jnp.float32),     # stacked h_n
                pltpu.SemaphoreType.DMA(()),                        # x HBM->VMEM copy
            ],
        ),
        out_shape=jax.ShapeDtypeStruct((n_layers * B_p, C_p), jnp.float32),
        compiler_params=pltpu.CompilerParams(
            dimension_semantics=("arbitrary",),
            vmem_limit_bytes=vmem_limit),
    )(x_p, wih_stack, whh_stack, gib_stack, bhn_stack, w_out_p, b_out_p)

    # Strip batch / class padding; row ordering matches PyTorch h_n.view(-1, H).
    return (logits_p.reshape(n_layers, B_p, C_p)[:, :B, :C]
            .reshape(n_layers * B, C))


# -----------------------------------------------------------------------------
# Pure-jnp reference (mirrors torch.nn.GRU + Linear, inference) for validation.
# mxu_dtype=bf16 emulates the kernel's MXU operand precision (f32 accumulation).
# -----------------------------------------------------------------------------
def gru_reference(x, params, *, n_layers, hidden_dim, mxu_dtype=jnp.float32):
    B, T, _ = x.shape

    def mm(a, b):
        return jnp.dot(a.astype(mxu_dtype), b.astype(mxu_dtype),
                       preferred_element_type=jnp.float32)

    layer_in = x.astype(jnp.float32)
    h_lasts = []
    for layer in range(n_layers):
        wih, whh, bih, bhh = params["gru"][layer]
        h = jnp.zeros((B, hidden_dim), jnp.float32)
        outs = []
        for t in range(T):
            gi = mm(layer_in[:, t, :], wih.T) + bih
            gh = mm(h, whh.T) + bhh
            i_r, i_z, i_n = jnp.split(gi, 3, axis=1)
            h_r, h_z, h_n = jnp.split(gh, 3, axis=1)
            r = jax.nn.sigmoid(i_r + h_r)
            z = jax.nn.sigmoid(i_z + h_z)
            n = jnp.tanh(i_n + r * h_n)
            h = (1.0 - z) * n + z * h
            outs.append(h)
        layer_in = jnp.stack(outs, axis=1)
        h_lasts.append(h)
    h_t = jnp.concatenate(h_lasts, axis=0)                 # (n_layers*B, H)
    return mm(h_t, params["out_w"].T) + params["out_b"]


# -----------------------------------------------------------------------------
# Deterministic parameter init, PyTorch-native layouts / uniform(-1/sqrt(H), 1/sqrt(H)).
# -----------------------------------------------------------------------------
def init_params(key, embed_dim, hidden_dim, n_layers, n_classes):
    k = 1.0 / math.sqrt(hidden_dim)
    gru = []
    for layer in range(n_layers):
        in_dim = embed_dim if layer == 0 else hidden_dim
        key, k1, k2, k3, k4 = jax.random.split(key, 5)
        wih = jax.random.uniform(k1, (3 * hidden_dim, in_dim), jnp.float32, -k, k)
        whh = jax.random.uniform(k2, (3 * hidden_dim, hidden_dim), jnp.float32, -k, k)
        bih = jax.random.uniform(k3, (3 * hidden_dim,), jnp.float32, -k, k)
        bhh = jax.random.uniform(k4, (3 * hidden_dim,), jnp.float32, -k, k)
        gru.append((wih, whh, bih, bhh))
    key, k5, k6 = jax.random.split(key, 3)
    w_out = jax.random.uniform(k5, (n_classes, hidden_dim), jnp.float32, -k, k)
    b_out = jax.random.uniform(k6, (n_classes,), jnp.float32, -k, k)
    return {"gru": gru, "out_w": w_out, "out_b": b_out}


if __name__ == "__main__":
    # Small hyperparameters consistent with the module's forward.
    batch, seq_len = 2, 8
    embed_dim, hidden_dim = 16, 32
    n_layers = 2
    n_classes = 4   # len(label_dict)

    key = jax.random.PRNGKey(0)
    key, xkey = jax.random.split(key)
    x = jax.random.normal(xkey, (batch, seq_len, embed_dim), jnp.float32)
    params = init_params(key, embed_dim, hidden_dim, n_layers, n_classes)

    fwd = jax.jit(functools.partial(basic_gru_forward, n_layers=n_layers,
                                    hidden_dim=hidden_dim, n_classes=n_classes))
    logit = fwd(x, params)
    jax.block_until_ready(logit)

    assert logit.shape == (n_layers * batch, n_classes), logit.shape

    # Tight check vs a reference that emulates the kernel numerics (bf16 MXU
    # operands, f32 accumulation), loose check vs exact-f32 PyTorch semantics.
    ref_bf16 = gru_reference(x, params, n_layers=n_layers, hidden_dim=hidden_dim,
                             mxu_dtype=jnp.bfloat16)
    ref_f32 = gru_reference(x, params, n_layers=n_layers, hidden_dim=hidden_dim,
                            mxu_dtype=jnp.float32)
    err_bf16 = float(jnp.max(jnp.abs(logit - ref_bf16)))
    err_f32 = float(jnp.max(jnp.abs(logit - ref_f32)))
    assert err_bf16 < 2e-3, f"vs bf16-emulating reference: {err_bf16}"
    assert err_f32 < 1e-1, f"vs exact f32 reference: {err_f32}"

    print("KERNEL_OK")
</pallas_src>

<mosaic_0001>
module attributes {stable_mosaic.version = 11 : i64} {
  func.func @kernel(%arg0: i32, %arg1: memref<64x128xf32, #tpu.memory_space<any>>, %arg2: memref<1x128x384xbf16, #tpu.memory_space<vmem>>, %arg3: memref<1x128x384xbf16, #tpu.memory_space<vmem>>, %arg4: memref<1x1x384xf32, #tpu.memory_space<vmem>>, %arg5: memref<1x1x128xf32, #tpu.memory_space<vmem>>, %arg6: memref<128x128xbf16, #tpu.memory_space<vmem>>, %arg7: memref<1x128xf32, #tpu.memory_space<vmem>>, %arg8: memref<16x128xf32, #tpu.memory_space<vmem>>, %arg9: memref<64x128xf32, #tpu.memory_space<vmem>>, %arg10: memref<64x384xf32, #tpu.memory_space<vmem>>, %arg11: memref<16x128xf32, #tpu.memory_space<vmem>>, %arg12: memref<!tpu.dma_semaphore, #tpu.memory_space<semaphore_mem>>) attributes {dimension_semantics = [#tpu.dimension_semantics<arbitrary>], iteration_bounds = array<i64: 2>, scalar_prefetch = 0 : i64, scratch_operands = 4 : i64, tpu.core_type = #tpu.core_type<tc>, window_params = [{}, {transform_indices = @transform_1, window_bounds = array<i64: 1, 128, 384>}, {transform_indices = @transform_2, window_bounds = array<i64: 1, 128, 384>}, {transform_indices = @transform_3, window_bounds = array<i64: 1, 1, 384>}, {transform_indices = @transform_4, window_bounds = array<i64: 1, 1, 128>}, {pipeline_mode = #tpu.pipeline_mode<synchronous>, transform_indices = @transform_5, window_bounds = array<i64: 128, 128>}, {pipeline_mode = #tpu.pipeline_mode<synchronous>, transform_indices = @transform_6, window_bounds = array<i64: 1, 128>}, {pipeline_mode = #tpu.pipeline_mode<synchronous>, transform_indices = @transform_7, window_bounds = array<i64: 16, 128>}]} {
    %c1_i32 = arith.constant 1 : i32
    %0 = arith.cmpi eq, %arg0, %c1_i32 : i32
    %c1_i32_0 = arith.constant 1 : i32
    %1 = arith.cmpi slt, %arg0, %c1_i32_0 : i32
    %c0_i32 = arith.constant 0 : i32
    %2 = arith.cmpi eq, %arg0, %c0_i32 : i32
    %3 = arith.extui %2 : i1 to i32
    %c0_i32_1 = arith.constant 0 : i32
    %4 = arith.cmpi ne, %3, %c0_i32_1 : i32
    scf.if %4 {
      tpu.enqueue_dma source(%arg1 : memref<64x128xf32, #tpu.memory_space<any>>) target(%arg9 : memref<64x128xf32, #tpu.memory_space<vmem>>) target_semaphore(%arg12 : memref<!tpu.dma_semaphore, #tpu.memory_space<semaphore_mem>>)
      tpu.wait_dma2 semaphore(%arg12 : memref<!tpu.dma_semaphore, #tpu.memory_space<semaphore_mem>>) src(%arg1 : memref<64x128xf32, #tpu.memory_space<any>>) dst(%arg9 : memref<64x128xf32, #tpu.memory_space<vmem>>)
    } else {
    }
    %c0 = arith.constant 0 : index
    %c0_2 = arith.constant 0 : index
    %c0_3 = arith.constant 0 : index
    %5 = vector.load %arg2[%c0, %c0_2, %c0_3] : memref<1x128x384xbf16, #tpu.memory_space<vmem>>, vector<1x128x384xbf16>
    %6 = vector.shape_cast %5 : vector<1x128x384xbf16> to vector<128x384xbf16>
    %c0_4 = arith.constant 0 : index
    %c0_5 = arith.constant 0 : index
    %c0_6 = arith.constant 0 : index
    %7 = vector.load %arg3[%c0_4, %c0_5, %c0_6] : memref<1x128x384xbf16, #tpu.memory_space<vmem>>, vector<1x128x384xbf16>
    %8 = vector.shape_cast %7 : vector<1x128x384xbf16> to vector<128x384xbf16>
    %c0_7 = arith.constant 0 : index
    %c0_8 = arith.constant 0 : index
    %c0_9 = arith.constant 0 : index
    %9 = vector.load %arg4[%c0_7, %c0_8, %c0_9] : memref<1x1x384xf32, #tpu.memory_space<vmem>>, vector<1x1x384xf32>
    %10 = vector.shape_cast %9 : vector<1x1x384xf32> to vector<1x384xf32>
    %c0_10 = arith.constant 0 : index
    %c0_11 = arith.constant 0 : index
    %c0_12 = arith.constant 0 : index
    %11 = vector.load %arg5[%c0_10, %c0_11, %c0_12] : memref<1x1x128xf32, #tpu.memory_space<vmem>>, vector<1x1x128xf32>
    %12 = vector.shape_cast %11 : vector<1x1x128xf32> to vector<1x128xf32>
    %13 = vector.shape_cast %12 : vector<1x128xf32> to vector<1x128xf32>
    %14 = vector.broadcast %13 : vector<1x128xf32> to vector<8x128xf32>
    %cst = arith.constant 0.000000e+00 : f32
    %15 = vector.broadcast %cst : f32 to vector<8x128xf32>
    %c0_i32_13 = arith.constant 0 : i32
    %c64_i32 = arith.constant 64 : i32
    %16 = arith.muli %c0_i32_13, %c64_i32 : i32
    %17 = tpu.assume_multiple %16, 8 : i32
    %18 = arith.index_cast %17 : i32 to index
    %c0_14 = arith.constant 0 : index
    %19 = vector.load %arg9[%18, %c0_14] : memref<64x128xf32, #tpu.memory_space<vmem>>, vector<64x128xf32>
    %20 = arith.truncf %19 : vector<64x128xf32> to vector<64x128xbf16>
    %cst_15 = arith.constant dense<0.000000e+00> : vector<64x384xf32>
    %21 = tpu.matmul %20, %6, %cst_15 {dimension_numbers = #tpu.dot_dimension_numbers<[1], [0], [0], [1], [0, 0, 1, 1], [], []>} : vector<64x128xbf16>, vector<128x384xbf16>, vector<64x384xf32> -> vector<64x384xf32>
    %22 = vector.broadcast %10 : vector<1x384xf32> to vector<64x384xf32>
    %23 = arith.addf %21, %22 : vector<64x384xf32>
    %c0_16 = arith.constant 0 : index
    %c0_17 = arith.constant 0 : index
    %24 = vector.load %arg10[%c0_16, %c0_17] : memref<64x384xf32, #tpu.memory_space<vmem>>, vector<64x384xf32>
    tpu.vector_store %arg10[%c0_16, %c0_17], %23 {strides = array<i32>} : memref<64x384xf32, #tpu.memory_space<vmem>>, vector<64x384xf32>,
    %c0_i32_18 = arith.constant 0 : i32
    %c8_i32 = arith.constant 8 : i32
    %25 = arith.muli %c0_i32_18, %c8_i32 : i32
    %26 = tpu.assume_multiple %25, 8 : i32
    %27 = arith.index_cast %26 : i32 to index
    %c0_19 = arith.constant 0 : index
    %28 = vector.load %arg10[%27, %c0_19] : memref<64x384xf32, #tpu.memory_space<vmem>>, vector<8x384xf32>
    %29 = arith.truncf %15 : vector<8x128xf32> to vector<8x128xbf16>
    %cst_20 = arith.constant dense<0.000000e+00> : vector<8x384xf32>
    %30 = tpu.matmul %29, %8, %cst_20 {dimension_numbers = #tpu.dot_dimension_numbers<[1], [0], [0], [1], [0, 0, 1, 1], [], []>} : vector<8x128xbf16>, vector<128x384xbf16>, vector<8x384xf32> -> vector<8x384xf32>
    %31 = vector.extract_strided_slice %28 {offsets = [0, 0], sizes = [8, 128], strides = [1, 1]} : vector<8x384xf32> to vector<8x128xf32>
    %32 = vector.extract_strided_slice %30 {offsets = [0, 0], sizes = [8, 128], strides = [1, 1]} : vector<8x384xf32> to vector<8x128xf32>
    %33 = arith.addf %31, %32 : vector<8x128xf32>
    %34 = arith.negf %33 : vector<8x128xf32>
    %35 = math.exp %34 : vector<8x128xf32>
    %cst_21 = arith.constant 1.000000e+00 : f32
    %36 = vector.broadcast %cst_21 : f32 to vector<8x128xf32>
    %37 = arith.addf %36, %35 : vector<8x128xf32>
    %38 = arith.divf %36, %37 : vector<8x128xf32>
    %39 = vector.extract_strided_slice %28 {offsets = [0, 128], sizes = [8, 128], strides = [1, 1]} : vector<8x384xf32> to vector<8x128xf32>
    %40 = vector.extract_strided_slice %30 {offsets = [0, 128], sizes = [8, 128], strides = [1, 1]} : vector<8x384xf32> to vector<8x128xf32>
    %41 = arith.addf %39, %40 : vector<8x128xf32>
    %42 = arith.negf %41 : vector<8x128xf32>
    %43 = math.exp %42 : vector<8x128xf32>
    %cst_22 = arith.constant 1.000000e+00 : f32
    %44 = vector.broadcast %cst_22 : f32 to vector<8x128xf32>
    %45 = arith.addf %44, %43 : vector<8x128xf32>
    %46 = arith.divf %44, %45 : vector<8x128xf32>
    %47 = vector.extract_strided_slice %28 {offsets = [0, 256], sizes = [8, 128], strides = [1, 1]} : vector<8x384xf32> to vector<8x128xf32>
    %48 = vector.extract_strided_slice %30 {offsets = [0, 256], sizes = [8, 128], strides = [1, 1]} : vector<8x384xf32> to vector<8x128xf32>
    %49 = arith.addf %48, %14 : vector<8x128xf32>
    %50 = arith.mulf %38, %49 : vector<8x128xf32>
    %51 = arith.addf %47, %50 : vector<8x128xf32>
    %52 = math.tanh %51 : vector<8x128xf32>
    %cst_23 = arith.constant 1.000000e+00 : f32
    %53 = vector.broadcast %cst_23 : f32 to vector<8x128xf32>
    %54 = arith.subf %53, %46 : vector<8x128xf32>
    %55 = arith.mulf %54, %52 : vector<8x128xf32>
    %56 = arith.mulf %46, %15 : vector<8x128xf32>
    %57 = arith.addf %55, %56 : vector<8x128xf32>
    %58 = arith.extui %1 : i1 to i32
    %c0_i32_24 = arith.constant 0 : i32
    %59 = arith.cmpi ne, %58, %c0_i32_24 : i32
    scf.if %59 {
      %c8_i32_80 = arith.constant 8 : i32
      %311 = arith.muli %c0_i32_18, %c8_i32_80 : i32
      %312 = arith.addi %17, %311 : i32
      %313 = tpu.assume_multiple %312, 8 : i32
      %314 = arith.index_cast %313 : i32 to index
      %c0_81 = arith.constant 0 : index
      %315 = vector.load %arg9[%314, %c0_81] : memref<64x128xf32, #tpu.memory_space<vmem>>, vector<8x128xf32>
      tpu.vector_store %arg9[%314, %c0_81], %57 {strides = array<i32>} : memref<64x128xf32, #tpu.memory_space<vmem>>, vector<8x128xf32>,
    } else {
    }
    %c1_i32_25 = arith.constant 1 : i32
    %c8_i32_26 = arith.constant 8 : i32
    %60 = arith.muli %c1_i32_25, %c8_i32_26 : i32
    %61 = tpu.assume_multiple %60, 8 : i32
    %62 = arith.index_cast %61 : i32 to index
    %c0_27 = arith.constant 0 : index
    %63 = vector.load %arg10[%62, %c0_27] : memref<64x384xf32, #tpu.memory_space<vmem>>, vector<8x384xf32>
    %64 = arith.truncf %57 : vector<8x128xf32> to vector<8x128xbf16>
    %cst_28 = arith.constant dense<0.000000e+00> : vector<8x384xf32>
    %65 = tpu.matmul %64, %8, %cst_28 {dimension_numbers = #tpu.dot_dimension_numbers<[1], [0], [0], [1], [0, 0, 1, 1], [], []>} : vector<8x128xbf16>, vector<128x384xbf16>, vector<8x384xf32> -> vector<8x384xf32>
    %66 = vector.extract_strided_slice %63 {offsets = [0, 0], sizes = [8, 128], strides = [1, 1]} : vector<8x384xf32> to vector<8x128xf32>
    %67 = vector.extract_strided_slice %65 {offsets = [0, 0], sizes = [8, 128], strides = [1, 1]} : vector<8x384xf32> to vector<8x128xf32>
    %68 = arith.addf %66, %67 : vector<8x128xf32>
    %69 = arith.negf %68 : vector<8x128xf32>
    %70 = math.exp %69 : vector<8x128xf32>
    %cst_29 = arith.constant 1.000000e+00 : f32
    %71 = vector.broadcast %cst_29 : f32 to vector<8x128xf32>
    %72 = arith.addf %71, %70 : vector<8x128xf32>
    %73 = arith.divf %71, %72 : vector<8x128xf32>
    %74 = vector.extract_strided_slice %63 {offsets = [0, 128], sizes = [8, 128], strides = [1, 1]} : vector<8x384xf32> to vector<8x128xf32>
    %75 = vector.extract_strided_slice %65 {offsets = [0, 128], sizes = [8, 128], strides = [1, 1]} : vector<8x384xf32> to vector<8x128xf32>
    %76 = arith.addf %74, %75 : vector<8x128xf32>
    %77 = arith.negf %76 : vector<8x128xf32>
    %78 = math.exp %77 : vector<8x128xf32>
    %cst_30 = arith.constant 1.000000e+00 : f32
    %79 = vector.broadcast %cst_30 : f32 to vector<8x128xf32>
    %80 = arith.addf %79, %78 : vector<8x128xf32>
    %81 = arith.divf %79, %80 : vector<8x128xf32>
    %82 = vector.extract_strided_slice %63 {offsets = [0, 256], sizes = [8, 128], strides = [1, 1]} : vector<8x384xf32> to vector<8x128xf32>
    %83 = vector.extract_strided_slice %65 {offsets = [0, 256], sizes = [8, 128], strides = [1, 1]} : vector<8x384xf32> to vector<8x128xf32>
    %84 = arith.addf %83, %14 : vector<8x128xf32>
    %85 = arith.mulf %73, %84 : vector<8x128xf32>
    %86 = arith.addf %82, %85 : vector<8x128xf32>
    %87 = math.tanh %86 : vector<8x128xf32>
    %cst_31 = arith.constant 1.000000e+00 : f32
    %88 = vector.broadcast %cst_31 : f32 to vector<8x128xf32>
    %89 = arith.subf %88, %81 : vector<8x128xf32>
    %90 = arith.mulf %89, %87 : vector<8x128xf32>
    %91 = arith.mulf %81, %57 : vector<8x128xf32>
    %92 = arith.addf %90, %91 : vector<8x128xf32>
    %93 = arith.extui %1 : i1 to i32
    %c0_i32_32 = arith.constant 0 : i32
    %94 = arith.cmpi ne, %93, %c0_i32_32 : i32
    scf.if %94 {
      %c8_i32_80 = arith.constant 8 : i32
      %311 = arith.muli %c1_i32_25, %c8_i32_80 : i32
      %312 = arith.addi %17, %311 : i32
      %313 = tpu.assume_multiple %312, 8 : i32
      %314 = arith.index_cast %313 : i32 to index
      %c0_81 = arith.constant 0 : index
      %315 = vector.load %arg9[%314, %c0_81] : memref<64x128xf32, #tpu.memory_space<vmem>>, vector<8x128xf32>
      tpu.vector_store %arg9[%314, %c0_81], %92 {strides = array<i32>} : memref<64x128xf32, #tpu.memory_space<vmem>>, vector<8x128xf32>,
    } else {
    }
    %c2_i32 = arith.constant 2 : i32
    %c8_i32_33 = arith.constant 8 : i32
    %95 = arith.muli %c2_i32, %c8_i32_33 : i32
    %96 = tpu.assume_multiple %95, 8 : i32
    %97 = arith.index_cast %96 : i32 to index
    %c0_34 = arith.constant 0 : index
    %98 = vector.load %arg10[%97, %c0_34] : memref<64x384xf32, #tpu.memory_space<vmem>>, vector<8x384xf32>
    %99 = arith.truncf %92 : vector<8x128xf32> to vector<8x128xbf16>
    %cst_35 = arith.constant dense<0.000000e+00> : vector<8x384xf32>
    %100 = tpu.matmul %99, %8, %cst_35 {dimension_numbers = #tpu.dot_dimension_numbers<[1], [0], [0], [1], [0, 0, 1, 1], [], []>} : vector<8x128xbf16>, vector<128x384xbf16>, vector<8x384xf32> -> vector<8x384xf32>
    %101 = vector.extract_strided_slice %98 {offsets = [0, 0], sizes = [8, 128], strides = [1, 1]} : vector<8x384xf32> to vector<8x128xf32>
    %102 = vector.extract_strided_slice %100 {offsets = [0, 0], sizes = [8, 128], strides = [1, 1]} : vector<8x384xf32> to vector<8x128xf32>
    %103 = arith.addf %101, %102 : vector<8x128xf32>
    %104 = arith.negf %103 : vector<8x128xf32>
    %105 = math.exp %104 : vector<8x128xf32>
    %cst_36 = arith.constant 1.000000e+00 : f32
    %106 = vector.broadcast %cst_36 : f32 to vector<8x128xf32>
    %107 = arith.addf %106, %105 : vector<8x128xf32>
    %108 = arith.divf %106, %107 : vector<8x128xf32>
    %109 = vector.extract_strided_slice %98 {offsets = [0, 128], sizes = [8, 128], strides = [1, 1]} : vector<8x384xf32> to vector<8x128xf32>
    %110 = vector.extract_strided_slice %100 {offsets = [0, 128], sizes = [8, 128], strides = [1, 1]} : vector<8x384xf32> to vector<8x128xf32>
    %111 = arith.addf %109, %110 : vector<8x128xf32>
    %112 = arith.negf %111 : vector<8x128xf32>
    %113 = math.exp %112 : vector<8x128xf32>
    %cst_37 = arith.constant 1.000000e+00 : f32
    %114 = vector.broadcast %cst_37 : f32 to vector<8x128xf32>
    %115 = arith.addf %114, %113 : vector<8x128xf32>
    %116 = arith.divf %114, %115 : vector<8x128xf32>
    %117 = vector.extract_strided_slice %98 {offsets = [0, 256], sizes = [8, 128], strides = [1, 1]} : vector<8x384xf32> to vector<8x128xf32>
    %118 = vector.extract_strided_slice %100 {offsets = [0, 256], sizes = [8, 128], strides = [1, 1]} : vector<8x384xf32> to vector<8x128xf32>
    %119 = arith.addf %118, %14 : vector<8x128xf32>
    %120 = arith.mulf %108, %119 : vector<8x128xf32>
    %121 = arith.addf %117, %120 : vector<8x128xf32>
    %122 = math.tanh %121 : vector<8x128xf32>
    %cst_38 = arith.constant 1.000000e+00 : f32
    %123 = vector.broadcast %cst_38 : f32 to vector<8x128xf32>
    %124 = arith.subf %123, %116 : vector<8x128xf32>
    %125 = arith.mulf %124, %122 : vector<8x128xf32>
    %126 = arith.mulf %116, %92 : vector<8x128xf32>
    %127 = arith.addf %125, %126 : vector<8x128xf32>
    %128 = arith.extui %1 : i1 to i32
    %c0_i32_39 = arith.constant 0 : i32
    %129 = arith.cmpi ne, %128, %c0_i32_39 : i32
    scf.if %129 {
      %c8_i32_80 = arith.constant 8 : i32
      %311 = arith.muli %c2_i32, %c8_i32_80 : i32
      %312 = arith.addi %17, %311 : i32
      %313 = tpu.assume_multiple %312, 8 : i32
      %314 = arith.index_cast %313 : i32 to index
      %c0_81 = arith.constant 0 : index
      %315 = vector.load %arg9[%314, %c0_81] : memref<64x128xf32, #tpu.memory_space<vmem>>, vector<8x128xf32>
      tpu.vector_store %arg9[%314, %c0_81], %127 {strides = array<i32>} : memref<64x128xf32, #tpu.memory_space<vmem>>, vector<8x128xf32>,
    } else {
    }
    %c3_i32 = arith.constant 3 : i32
    %c8_i32_40 = arith.constant 8 : i32
    %130 = arith.muli %c3_i32, %c8_i32_40 : i32
    %131 = tpu.assume_multiple %130, 8 : i32
    %132 = arith.index_cast %131 : i32 to index
    %c0_41 = arith.constant 0 : index
    %133 = vector.load %arg10[%132, %c0_41] : memref<64x384xf32, #tpu.memory_space<vmem>>, vector<8x384xf32>
    %134 = arith.truncf %127 : vector<8x128xf32> to vector<8x128xbf16>
    %cst_42 = arith.constant dense<0.000000e+00> : vector<8x384xf32>
    %135 = tpu.matmul %134, %8, %cst_42 {dimension_numbers = #tpu.dot_dimension_numbers<[1], [0], [0], [1], [0, 0, 1, 1], [], []>} : vector<8x128xbf16>, vector<128x384xbf16>, vector<8x384xf32> -> vector<8x384xf32>
    %136 = vector.extract_strided_slice %133 {offsets = [0, 0], sizes = [8, 128], strides = [1, 1]} : vector<8x384xf32> to vector<8x128xf32>
    %137 = vector.extract_strided_slice %135 {offsets = [0, 0], sizes = [8, 128], strides = [1, 1]} : vector<8x384xf32> to vector<8x128xf32>
    %138 = arith.addf %136, %137 : vector<8x128xf32>
    %139 = arith.negf %138 : vector<8x128xf32>
    %140 = math.exp %139 : vector<8x128xf32>
    %cst_43 = arith.constant 1.000000e+00 : f32
    %141 = vector.broadcast %cst_43 : f32 to vector<8x128xf32>
    %142 = arith.addf %141, %140 : vector<8x128xf32>
    %143 = arith.divf %141, %142 : vector<8x128xf32>
    %144 = vector.extract_strided_slice %133 {offsets = [0, 128], sizes = [8, 128], strides = [1, 1]} : vector<8x384xf32> to vector<8x128xf32>
    %145 = vector.extract_strided_slice %135 {offsets = [0, 128], sizes = [8, 128], strides = [1, 1]} : vector<8x384xf32> to vector<8x128xf32>
    %146 = arith.addf %144, %145 : vector<8x128xf32>
    %147 = arith.negf %146 : vector<8x128xf32>
    %148 = math.exp %147 : vector<8x128xf32>
    %cst_44 = arith.constant 1.000000e+00 : f32
    %149 = vector.broadcast %cst_44 : f32 to vector<8x128xf32>
    %150 = arith.addf %149, %148 : vector<8x128xf32>
    %151 = arith.divf %149, %150 : vector<8x128xf32>
    %152 = vector.extract_strided_slice %133 {offsets = [0, 256], sizes = [8, 128], strides = [1, 1]} : vector<8x384xf32> to vector<8x128xf32>
    %153 = vector.extract_strided_slice %135 {offsets = [0, 256], sizes = [8, 128], strides = [1, 1]} : vector<8x384xf32> to vector<8x128xf32>
    %154 = arith.addf %153, %14 : vector<8x128xf32>
    %155 = arith.mulf %143, %154 : vector<8x128xf32>
    %156 = arith.addf %152, %155 : vector<8x128xf32>
    %157 = math.tanh %156 : vector<8x128xf32>
    %cst_45 = arith.constant 1.000000e+00 : f32
    %158 = vector.broadcast %cst_45 : f32 to vector<8x128xf32>
    %159 = arith.subf %158, %151 : vector<8x128xf32>
    %160 = arith.mulf %159, %157 : vector<8x128xf32>
    %161 = arith.mulf %151, %127 : vector<8x128xf32>
    %162 = arith.addf %160, %161 : vector<8x128xf32>
    %163 = arith.extui %1 : i1 to i32
    %c0_i32_46 = arith.constant 0 : i32
    %164 = arith.cmpi ne, %163, %c0_i32_46 : i32
    scf.if %164 {
      %c8_i32_80 = arith.constant 8 : i32
      %311 = arith.muli %c3_i32, %c8_i32_80 : i32
      %312 = arith.addi %17, %311 : i32
      %313 = tpu.assume_multiple %312, 8 : i32
      %314 = arith.index_cast %313 : i32 to index
      %c0_81 = arith.constant 0 : index
      %315 = vector.load %arg9[%314, %c0_81] : memref<64x128xf32, #tpu.memory_space<vmem>>, vector<8x128xf32>
      tpu.vector_store %arg9[%314, %c0_81], %162 {strides = array<i32>} : memref<64x128xf32, #tpu.memory_space<vmem>>, vector<8x128xf32>,
    } else {
    }
    %c4_i32 = arith.constant 4 : i32
    %c8_i32_47 = arith.constant 8 : i32
    %165 = arith.muli %c4_i32, %c8_i32_47 : i32
    %166 = tpu.assume_multiple %165, 8 : i32
    %167 = arith.index_cast %166 : i32 to index
    %c0_48 = arith.constant 0 : index
    %168 = vector.load %arg10[%167, %c0_48] : memref<64x384xf32, #tpu.memory_space<vmem>>, vector<8x384xf32>
    %169 = arith.truncf %162 : vector<8x128xf32> to vector<8x128xbf16>
    %cst_49 = arith.constant dense<0.000000e+00> : vector<8x384xf32>
    %170 = tpu.matmul %169, %8, %cst_49 {dimension_numbers = #tpu.dot_dimension_numbers<[1], [0], [0], [1], [0, 0, 1, 1], [], []>} : vector<8x128xbf16>, vector<128x384xbf16>, vector<8x384xf32> -> vector<8x384xf32>
    %171 = vector.extract_strided_slice %168 {offsets = [0, 0], sizes = [8, 128], strides = [1, 1]} : vector<8x384xf32> to vector<8x128xf32>
    %172 = vector.extract_strided_slice %170 {offsets = [0, 0], sizes = [8, 128], strides = [1, 1]} : vector<8x384xf32> to vector<8x128xf32>
    %173 = arith.addf %171, %172 : vector<8x128xf32>
    %174 = arith.negf %173 : vector<8x128xf32>
    %175 = math.exp %174 : vector<8x128xf32>
    %cst_50 = arith.constant 1.000000e+00 : f32
    %176 = vector.broadcast %cst_50 : f32 to vector<8x128xf32>
    %177 = arith.addf %176, %175 : vector<8x128xf32>
    %178 = arith.divf %176, %177 : vector<8x128xf32>
    %179 = vector.extract_strided_slice %168 {offsets = [0, 128], sizes = [8, 128], strides = [1, 1]} : vector<8x384xf32> to vector<8x128xf32>
    %180 = vector.extract_strided_slice %170 {offsets = [0, 128], sizes = [8, 128], strides = [1, 1]} : vector<8x384xf32> to vector<8x128xf32>
    %181 = arith.addf %179, %180 : vector<8x128xf32>
    %182 = arith.negf %181 : vector<8x128xf32>
    %183 = math.exp %182 : vector<8x128xf32>
    %cst_51 = arith.constant 1.000000e+00 : f32
    %184 = vector.broadcast %cst_51 : f32 to vector<8x128xf32>
    %185 = arith.addf %184, %183 : vector<8x128xf32>
    %186 = arith.divf %184, %185 : vector<8x128xf32>
    %187 = vector.extract_strided_slice %168 {offsets = [0, 256], sizes = [8, 128], strides = [1, 1]} : vector<8x384xf32> to vector<8x128xf32>
    %188 = vector.extract_strided_slice %170 {offsets = [0, 256], sizes = [8, 128], strides = [1, 1]} : vector<8x384xf32> to vector<8x128xf32>
    %189 = arith.addf %188, %14 : vector<8x128xf32>
    %190 = arith.mulf %178, %189 : vector<8x128xf32>
    %191 = arith.addf %187, %190 : vector<8x128xf32>
    %192 = math.tanh %191 : vector<8x128xf32>
    %cst_52 = arith.constant 1.000000e+00 : f32
    %193 = vector.broadcast %cst_52 : f32 to vector<8x128xf32>
    %194 = arith.subf %193, %186 : vector<8x128xf32>
    %195 = arith.mulf %194, %192 : vector<8x128xf32>
    %196 = arith.mulf %186, %162 : vector<8x128xf32>
    %197 = arith.addf %195, %196 : vector<8x128xf32>
    %198 = arith.extui %1 : i1 to i32
    %c0_i32_53 = arith.constant 0 : i32
    %199 = arith.cmpi ne, %198, %c0_i32_53 : i32
    scf.if %199 {
      %c8_i32_80 = arith.constant 8 : i32
      %311 = arith.muli %c4_i32, %c8_i32_80 : i32
      %312 = arith.addi %17, %311 : i32
      %313 = tpu.assume_multiple %312, 8 : i32
      %314 = arith.index_cast %313 : i32 to index
      %c0_81 = arith.constant 0 : index
      %315 = vector.load %arg9[%314, %c0_81] : memref<64x128xf32, #tpu.memory_space<vmem>>, vector<8x128xf32>
      tpu.vector_store %arg9[%314, %c0_81], %197 {strides = array<i32>} : memref<64x128xf32, #tpu.memory_space<vmem>>, vector<8x128xf32>,
    } else {
    }
    %c5_i32 = arith.constant 5 : i32
    %c8_i32_54 = arith.constant 8 : i32
    %200 = arith.muli %c5_i32, %c8_i32_54 : i32
    %201 = tpu.assume_multiple %200, 8 : i32
    %202 = arith.index_cast %201 : i32 to index
    %c0_55 = arith.constant 0 : index
    %203 = vector.load %arg10[%202, %c0_55] : memref<64x384xf32, #tpu.memory_space<vmem>>, vector<8x384xf32>
    %204 = arith.truncf %197 : vector<8x128xf32> to vector<8x128xbf16>
    %cst_56 = arith.constant dense<0.000000e+00> : vector<8x384xf32>
    %205 = tpu.matmul %204, %8, %cst_56 {dimension_numbers = #tpu.dot_dimension_numbers<[1], [0], [0], [1], [0, 0, 1, 1], [], []>} : vector<8x128xbf16>, vector<128x384xbf16>, vector<8x384xf32> -> vector<8x384xf32>
    %206 = vector.extract_strided_slice %203 {offsets = [0, 0], sizes = [8, 128], strides = [1, 1]} : vector<8x384xf32> to vector<8x128xf32>
    %207 = vector.extract_strided_slice %205 {offsets = [0, 0], sizes = [8, 128], strides = [1, 1]} : vector<8x384xf32> to vector<8x128xf32>
    %208 = arith.addf %206, %207 : vector<8x128xf32>
    %209 = arith.negf %208 : vector<8x128xf32>
    %210 = math.exp %209 : vector<8x128xf32>
    %cst_57 = arith.constant 1.000000e+00 : f32
    %211 = vector.broadcast %cst_57 : f32 to vector<8x128xf32>
    %212 = arith.addf %211, %210 : vector<8x128xf32>
    %213 = arith.divf %211, %212 : vector<8x128xf32>
    %214 = vector.extract_strided_slice %203 {offsets = [0, 128], sizes = [8, 128], strides = [1, 1]} : vector<8x384xf32> to vector<8x128xf32>
    %215 = vector.extract_strided_slice %205 {offsets = [0, 128], sizes = [8, 128], strides = [1, 1]} : vector<8x384xf32> to vector<8x128xf32>
    %216 = arith.addf %214, %215 : vector<8x128xf32>
    %217 = arith.negf %216 : vector<8x128xf32>
    %218 = math.exp %217 : vector<8x128xf32>
    %cst_58 = arith.constant 1.000000e+00 : f32
    %219 = vector.broadcast %cst_58 : f32 to vector<8x128xf32>
    %220 = arith.addf %219, %218 : vector<8x128xf32>
    %221 = arith.divf %219, %220 : vector<8x128xf32>
    %222 = vector.extract_strided_slice %203 {offsets = [0, 256], sizes = [8, 128], strides = [1, 1]} : vector<8x384xf32> to vector<8x128xf32>
    %223 = vector.extract_strided_slice %205 {offsets = [0, 256], sizes = [8, 128], strides = [1, 1]} : vector<8x384xf32> to vector<8x128xf32>
    %224 = arith.addf %223, %14 : vector<8x128xf32>
    %225 = arith.mulf %213, %224 : vector<8x128xf32>
    %226 = arith.addf %222, %225 : vector<8x128xf32>
    %227 = math.tanh %226 : vector<8x128xf32>
    %cst_59 = arith.constant 1.000000e+00 : f32
    %228 = vector.broadcast %cst_59 : f32 to vector<8x128xf32>
    %229 = arith.subf %228, %221 : vector<8x128xf32>
    %230 = arith.mulf %229, %227 : vector<8x128xf32>
    %231 = arith.mulf %221, %197 : vector<8x128xf32>
    %232 = arith.addf %230, %231 : vector<8x128xf32>
    %233 = arith.extui %1 : i1 to i32
    %c0_i32_60 = arith.constant 0 : i32
    %234 = arith.cmpi ne, %233, %c0_i32_60 : i32
    scf.if %234 {
      %c8_i32_80 = arith.constant 8 : i32
      %311 = arith.muli %c5_i32, %c8_i32_80 : i32
      %312 = arith.addi %17, %311 : i32
      %313 = tpu.assume_multiple %312, 8 : i32
      %314 = arith.index_cast %313 : i32 to index
      %c0_81 = arith.constant 0 : index
      %315 = vector.load %arg9[%314, %c0_81] : memref<64x128xf32, #tpu.memory_space<vmem>>, vector<8x128xf32>
      tpu.vector_store %arg9[%314, %c0_81], %232 {strides = array<i32>} : memref<64x128xf32, #tpu.memory_space<vmem>>, vector<8x128xf32>,
    } else {
    }
    %c6_i32 = arith.constant 6 : i32
    %c8_i32_61 = arith.constant 8 : i32
    %235 = arith.muli %c6_i32, %c8_i32_61 : i32
    %236 = tpu.assume_multiple %235, 8 : i32
    %237 = arith.index_cast %236 : i32 to index
    %c0_62 = arith.constant 0 : index
    %238 = vector.load %arg10[%237, %c0_62] : memref<64x384xf32, #tpu.memory_space<vmem>>, vector<8x384xf32>
    %239 = arith.truncf %232 : vector<8x128xf32> to vector<8x128xbf16>
    %cst_63 = arith.constant dense<0.000000e+00> : vector<8x384xf32>
    %240 = tpu.matmul %239, %8, %cst_63 {dimension_numbers = #tpu.dot_dimension_numbers<[1], [0], [0], [1], [0, 0, 1, 1], [], []>} : vector<8x128xbf16>, vector<128x384xbf16>, vector<8x384xf32> -> vector<8x384xf32>
    %241 = vector.extract_strided_slice %238 {offsets = [0, 0], sizes = [8, 128], strides = [1, 1]} : vector<8x384xf32> to vector<8x128xf32>
    %242 = vector.extract_strided_slice %240 {offsets = [0, 0], sizes = [8, 128], strides = [1, 1]} : vector<8x384xf32> to vector<8x128xf32>
    %243 = arith.addf %241, %242 : vector<8x128xf32>
    %244 = arith.negf %243 : vector<8x128xf32>
    %245 = math.exp %244 : vector<8x128xf32>
    %cst_64 = arith.constant 1.000000e+00 : f32
    %246 = vector.broadcast %cst_64 : f32 to vector<8x128xf32>
    %247 = arith.addf %246, %245 : vector<8x128xf32>
    %248 = arith.divf %246, %247 : vector<8x128xf32>
    %249 = vector.extract_strided_slice %238 {offsets = [0, 128], sizes = [8, 128], strides = [1, 1]} : vector<8x384xf32> to vector<8x128xf32>
    %250 = vector.extract_strided_slice %240 {offsets = [0, 128], sizes = [8, 128], strides = [1, 1]} : vector<8x384xf32> to vector<8x128xf32>
    %251 = arith.addf %249, %250 : vector<8x128xf32>
    %252 = arith.negf %251 : vector<8x128xf32>
    %253 = math.exp %252 : vector<8x128xf32>
    %cst_65 = arith.constant 1.000000e+00 : f32
    %254 = vector.broadcast %cst_65 : f32 to vector<8x128xf32>
    %255 = arith.addf %254, %253 : vector<8x128xf32>
    %256 = arith.divf %254, %255 : vector<8x128xf32>
    %257 = vector.extract_strided_slice %238 {offsets = [0, 256], sizes = [8, 128], strides = [1, 1]} : vector<8x384xf32> to vector<8x128xf32>
    %258 = vector.extract_strided_slice %240 {offsets = [0, 256], sizes = [8, 128], strides = [1, 1]} : vector<8x384xf32> to vector<8x128xf32>
    %259 = arith.addf %258, %14 : vector<8x128xf32>
    %260 = arith.mulf %248, %259 : vector<8x128xf32>
    %261 = arith.addf %257, %260 : vector<8x128xf32>
    %262 = math.tanh %261 : vector<8x128xf32>
    %cst_66 = arith.constant 1.000000e+00 : f32
    %263 = vector.broadcast %cst_66 : f32 to vector<8x128xf32>
    %264 = arith.subf %263, %256 : vector<8x128xf32>
    %265 = arith.mulf %264, %262 : vector<8x128xf32>
    %266 = arith.mulf %256, %232 : vector<8x128xf32>
    %267 = arith.addf %265, %266 : vector<8x128xf32>
    %268 = arith.extui %1 : i1 to i32
    %c0_i32_67 = arith.constant 0 : i32
    %269 = arith.cmpi ne, %268, %c0_i32_67 : i32
    scf.if %269 {
      %c8_i32_80 = arith.constant 8 : i32
      %311 = arith.muli %c6_i32, %c8_i32_80 : i32
      %312 = arith.addi %17, %311 : i32
      %313 = tpu.assume_multiple %312, 8 : i32
      %314 = arith.index_cast %313 : i32 to index
      %c0_81 = arith.constant 0 : index
      %315 = vector.load %arg9[%314, %c0_81] : memref<64x128xf32, #tpu.memory_space<vmem>>, vector<8x128xf32>
      tpu.vector_store %arg9[%314, %c0_81], %267 {strides = array<i32>} : memref<64x128xf32, #tpu.memory_space<vmem>>, vector<8x128xf32>,
    } else {
    }
    %c7_i32 = arith.constant 7 : i32
    %c8_i32_68 = arith.constant 8 : i32
    %270 = arith.muli %c7_i32, %c8_i32_68 : i32
    %271 = tpu.assume_multiple %270, 8 : i32
    %272 = arith.index_cast %271 : i32 to index
    %c0_69 = arith.constant 0 : index
    %273 = vector.load %arg10[%272, %c0_69] : memref<64x384xf32, #tpu.memory_space<vmem>>, vector<8x384xf32>
    %274 = arith.truncf %267 : vector<8x128xf32> to vector<8x128xbf16>
    %cst_70 = arith.constant dense<0.000000e+00> : vector<8x384xf32>
    %275 = tpu.matmul %274, %8, %cst_70 {dimension_numbers = #tpu.dot_dimension_numbers<[1], [0], [0], [1], [0, 0, 1, 1], [], []>} : vector<8x128xbf16>, vector<128x384xbf16>, vector<8x384xf32> -> vector<8x384xf32>
    %276 = vector.extract_strided_slice %273 {offsets = [0, 0], sizes = [8, 128], strides = [1, 1]} : vector<8x384xf32> to vector<8x128xf32>
    %277 = vector.extract_strided_slice %275 {offsets = [0, 0], sizes = [8, 128], strides = [1, 1]} : vector<8x384xf32> to vector<8x128xf32>
    %278 = arith.addf %276, %277 : vector<8x128xf32>
    %279 = arith.negf %278 : vector<8x128xf32>
    %280 = math.exp %279 : vector<8x128xf32>
    %cst_71 = arith.constant 1.000000e+00 : f32
    %281 = vector.broadcast %cst_71 : f32 to vector<8x128xf32>
    %282 = arith.addf %281, %280 : vector<8x128xf32>
    %283 = arith.divf %281, %282 : vector<8x128xf32>
    %284 = vector.extract_strided_slice %273 {offsets = [0, 128], sizes = [8, 128], strides = [1, 1]} : vector<8x384xf32> to vector<8x128xf32>
    %285 = vector.extract_strided_slice %275 {offsets = [0, 128], sizes = [8, 128], strides = [1, 1]} : vector<8x384xf32> to vector<8x128xf32>
    %286 = arith.addf %284, %285 : vector<8x128xf32>
    %287 = arith.negf %286 : vector<8x128xf32>
    %288 = math.exp %287 : vector<8x128xf32>
    %cst_72 = arith.constant 1.000000e+00 : f32
    %289 = vector.broadcast %cst_72 : f32 to vector<8x128xf32>
    %290 = arith.addf %289, %288 : vector<8x128xf32>
    %291 = arith.divf %289, %290 : vector<8x128xf32>
    %292 = vector.extract_strided_slice %273 {offsets = [0, 256], sizes = [8, 128], strides = [1, 1]} : vector<8x384xf32> to vector<8x128xf32>
    %293 = vector.extract_strided_slice %275 {offsets = [0, 256], sizes = [8, 128], strides = [1, 1]} : vector<8x384xf32> to vector<8x128xf32>
    %294 = arith.addf %293, %14 : vector<8x128xf32>
    %295 = arith.mulf %283, %294 : vector<8x128xf32>
    %296 = arith.addf %292, %295 : vector<8x128xf32>
    %297 = math.tanh %296 : vector<8x128xf32>
    %cst_73 = arith.constant 1.000000e+00 : f32
    %298 = vector.broadcast %cst_73 : f32 to vector<8x128xf32>
    %299 = arith.subf %298, %291 : vector<8x128xf32>
    %300 = arith.mulf %299, %297 : vector<8x128xf32>
    %301 = arith.mulf %291, %267 : vector<8x128xf32>
    %302 = arith.addf %300, %301 : vector<8x128xf32>
    %303 = arith.extui %1 : i1 to i32
    %c0_i32_74 = arith.constant 0 : i32
    %304 = arith.cmpi ne, %303, %c0_i32_74 : i32
    scf.if %304 {
      %c8_i32_80 = arith.constant 8 : i32
      %311 = arith.muli %c7_i32, %c8_i32_80 : i32
      %312 = arith.addi %17, %311 : i32
      %313 = tpu.assume_multiple %312, 8 : i32
      %314 = arith.index_cast %313 : i32 to index
      %c0_81 = arith.constant 0 : index
      %315 = vector.load %arg9[%314, %c0_81] : memref<64x128xf32, #tpu.memory_space<vmem>>, vector<8x128xf32>
      tpu.vector_store %arg9[%314, %c0_81], %302 {strides = array<i32>} : memref<64x128xf32, #tpu.memory_space<vmem>>, vector<8x128xf32>,
    } else {
    }
    %c8_i32_75 = arith.constant 8 : i32
    %c1_i32_76 = arith.constant 1 : i32
    %c8_i32_77 = arith.constant 8 : i32
    %305 = arith.muli %arg0, %c8_i32_77 : i32
    %306 = tpu.assume_multiple %305, 8 : i32
    %307 = arith.index_cast %306 : i32 to index
    %c0_78 = arith.constant 0 : index
    %308 = vector.load %arg11[%307, %c0_78] : memref<16x128xf32, #tpu.memory_space<vmem>>, vector<8x128xf32>
    tpu.vector_store %arg11[%307, %c0_78], %302 {strides = array<i32>} : memref<16x128xf32, #tpu.memory_space<vmem>>, vector<8x128xf32>,
    %309 = arith.extui %0 : i1 to i32
    %c0_i32_79 = arith.constant 0 : i32
    %310 = arith.cmpi ne, %309, %c0_i32_79 : i32
    scf.if %310 {
      %c0_80 = arith.constant 0 : index
      %c0_81 = arith.constant 0 : index
      %311 = vector.load %arg11[%c0_80, %c0_81] : memref<16x128xf32, #tpu.memory_space<vmem>>, vector<16x128xf32>
      %312 = arith.truncf %311 : vector<16x128xf32> to vector<16x128xbf16>
      %c0_82 = arith.constant 0 : index
      %c0_83 = arith.constant 0 : index
      %313 = vector.load %arg6[%c0_82, %c0_83] : memref<128x128xbf16, #tpu.memory_space<vmem>>, vector<128x128xbf16>
      %cst_84 = arith.constant dense<0.000000e+00> : vector<16x128xf32>
      %314 = tpu.matmul %312, %313, %cst_84 {dimension_numbers = #tpu.dot_dimension_numbers<[1], [0], [0], [1], [0, 0, 1, 1], [], []>} : vector<16x128xbf16>, vector<128x128xbf16>, vector<16x128xf32> -> vector<16x128xf32>
      %c0_85 = arith.constant 0 : index
      %c0_86 = arith.constant 0 : index
      %315 = vector.load %arg7[%c0_85, %c0_86] : memref<1x128xf32, #tpu.memory_space<vmem>>, vector<1x128xf32>
      %316 = vector.broadcast %315 : vector<1x128xf32> to vector<16x128xf32>
      %317 = arith.addf %314, %316 : vector<16x128xf32>
      %c0_87 = arith.constant 0 : index
      %c0_88 = arith.constant 0 : index
      %318 = vector.load %arg8[%c0_87, %c0_88] : memref<16x128xf32, #tpu.memory_space<vmem>>, vector<16x128xf32>
      tpu.vector_store %arg8[%c0_87, %c0_88], %317 {strides = array<i32>} : memref<16x128xf32, #tpu.memory_space<vmem>>, vector<16x128xf32>,
    } else {
    }
    return
  }
  func.func @transform_1(%arg0: i32) -> (i32, i32, i32) {
    %c0_i32 = arith.constant 0 : i32
    %c0_i32_0 = arith.constant 0 : i32
    %c0_i32_1 = arith.constant 0 : i32
    return %arg0, %c0_i32, %c0_i32_0 : i32, i32, i32
  }
  func.func @transform_2(%arg0: i32) -> (i32, i32, i32) {
    %c0_i32 = arith.constant 0 : i32
    %c0_i32_0 = arith.constant 0 : i32
    %c0_i32_1 = arith.constant 0 : i32
    return %arg0, %c0_i32, %c0_i32_0 : i32, i32, i32
  }
  func.func @transform_3(%arg0: i32) -> (i32, i32, i32) {
    %c0_i32 = arith.constant 0 : i32
    %c0_i32_0 = arith.constant 0 : i32
    %c0_i32_1 = arith.constant 0 : i32
    return %arg0, %c0_i32, %c0_i32_0 : i32, i32, i32
  }
  func.func @transform_4(%arg0: i32) -> (i32, i32, i32) {
    %c0_i32 = arith.constant 0 : i32
    %c0_i32_0 = arith.constant 0 : i32
    %c0_i32_1 = arith.constant 0 : i32
    return %arg0, %c0_i32, %c0_i32_0 : i32, i32, i32
  }
  func.func @transform_5(%arg0: i32) -> (i32, i32) {
    %c0_i32 = arith.constant 0 : i32
    %c0_i32_0 = arith.constant 0 : i32
    %c0_i32_1 = arith.constant 0 : i32
    return %c0_i32, %c0_i32_0 : i32, i32
  }
  func.func @transform_6(%arg0: i32) -> (i32, i32) {
    %c0_i32 = arith.constant 0 : i32
    %c0_i32_0 = arith.constant 0 : i32
    %c0_i32_1 = arith.constant 0 : i32
    return %c0_i32, %c0_i32_0 : i32, i32
  }
  func.func @transform_7(%arg0: i32) -> (i32, i32) {
    %c0_i32 = arith.constant 0 : i32
    %c0_i32_0 = arith.constant 0 : i32
    %c0_i32_1 = arith.constant 0 : i32
    return %c0_i32, %c0_i32_0 : i32, i32
  }
}

</mosaic_0001>

<llo_original>
// kernel: basic_gru_forward.1
$region0: #{basic_gru_forward.1}
  #allocation0 [shape = 'u32[]', space=smem, size = 0x4, offset = 0x4, fixed_abs, tag = 'smem constant byte address 0x4 - core index']
  #allocation1 [shape = 'u32[72,128]{1,0:T(1,128)}', space=vmem, size = 0x9000, scoped, tag = 'internal scratch']
  #allocation2 [shape = 'f32[64,128]{1,0:T(8,128)}', space=vmem, size = 0x8000, scoped, tag = 'scratch operand']
  #allocation3 [shape = 'f32[64,384]{1,0:T(8,128)}', space=vmem, size = 0x18000, scoped, tag = 'scratch operand']
  #allocation4 [shape = 'f32[16,128]{1,0:T(8,128)}', space=vmem, size = 0x2000, scoped, tag = 'scratch operand']
  #allocation5 [shape = 's32[1]{0}', space=sflag, size = 0x4, scoped, tag = 'scratch operand']
  #allocation6 [shape = 's32[]', space=sflag, size = 0x4, offset = 0, fixed_abs, tag = 'sflag constant byte address 0x0 - dummy sync flag']
  %s0 = inlined_call_operand.vmem [shape: f32[64,128], index: 0, kind: input, shape index: {}]
  %s1 = inlined_call_operand.vmem [shape: bf16[2,128,384], index: 1, kind: input, shape index: {}]
  %s2 = inlined_call_operand.vmem [shape: bf16[2,128,384], index: 2, kind: input, shape index: {}]
  %s3 = inlined_call_operand.vmem [shape: f32[2,1,384], index: 3, kind: input, shape index: {}]
  %s4 = inlined_call_operand.vmem [shape: f32[2,1,128], index: 4, kind: input, shape index: {}]
  %s5 = inlined_call_operand.vmem [shape: bf16[128,128], index: 5, kind: input, shape index: {}]
  %s6 = inlined_call_operand.vmem [shape: f32[1,128], index: 6, kind: input, shape index: {}]
  %s7 = inlined_call_operand.vmem [shape: f32[16,128], index: 7, kind: output, shape index: {}]
  %s8 = sld [smem:[#allocation0]]
  $region116: #{basic_gru_forward.1} parent=0
    _
  %s10 = ssub.s32 1, %s8
  %s11 = scalar_select 0, %s10, %s8
  loop: start=0, step=1, limit=4
  $region2: #{basic_gru_forward.1} parent=0 // loop_pre_header
    _
  $region3: #{basic_gru_forward.1} parent=0 // loop_header
    %s13 = sphi 0, %s17
    %p14 = scmp.ge.s32.totalorder %s13, 4
    %s23 = sphi 0, %s25
    %s26 = sphi 0, %s23
    %s27 = sphi 0, %s26
    %s43 = sphi 0, %s27
    %s49 = sphi 0, %s51
    %s52 = sphi 0, %s49
    %s53 = sphi 0, %s52
    %s69 = sphi 0, %s53
    %s75 = sphi 0, %s77
    %s78 = sphi 0, %s75
    %s79 = sphi 0, %s78
    %s95 = sphi 0, %s79
    %s101 = sphi 0, %s103
    %s104 = sphi 0, %s101
    %s105 = sphi 0, %s104
    %s121 = sphi 0, %s105
    %s125 = sphi 0, %s125
    %s127 = sphi 0, %s125
    %s128 = sphi 0, %s127
    %s142 = sphi 0, %s128
    %s146 = sphi 0, %s146
    %s148 = sphi 0, %s146
    %s149 = sphi 0, %s148
    %s163 = sphi 0, %s149
    %s167 = sphi 0, %s167
    %s169 = sphi 0, %s167
    %s170 = sphi 0, %s169
    %s184 = sphi 0, %s170
  $region4: #{basic_gru_forward.1} parent=0 // loop_header_branch
    %16 = sbr.rel (%p14) target = $region8
  $region5: #{basic_gru_forward.1} parent=0 // loop_body
    %s18 = ssub.s32 %s13, 1
    %s19 = ssub.s32 %s13, 2
    %s20 = sadd.s32 %s13, 1
    %s21 = ssub.s32 %s13, %s20
    %p22 = scmp.eq.s32.totalorder %s21, 0
    %s24 = sadd.s32 %s23, 1
    %s25 = scalar_select %p22, %s23, %s24
    %p28 = pneg %p22
    %p29 = scmp.eq.s32.totalorder %s13, 1
    %p30 = por %p28, %p29
    %p31 = scmp.ne.s32.totalorder %s23, %s26
    %p32 = scmp.eq.s32.totalorder %s13, 0
    %p33 = por %p31, %p32
    %p34 = scmp.ne.s32.totalorder %s23, %s26
    %p35 = scmp.eq.s32.totalorder %s18, 1
    %p36 = por %p34, %p35
    %p37 = scmp.ne.s32.totalorder %s26, %s27
    %p38 = scmp.eq.s32.totalorder %s18, 0
    %p39 = por %p37, %p38
    %p40 = scmp.ne.s32.totalorder %s26, %s27
    %p41 = scmp.eq.s32.totalorder %s19, 1
    %p42 = por %p40, %p41
    %p44 = scmp.ne.s32.totalorder %s27, %s43
    %p45 = scmp.eq.s32.totalorder %s19, 0
    %p46 = por %p44, %p45
    %s47 = ssub.s32 %s13, %s20
    %p48 = scmp.eq.s32.totalorder %s47, 0
    %s50 = sadd.s32 %s49, 1
    %s51 = scalar_select %p48, %s49, %s50
    %p54 = pneg %p48
    %p55 = scmp.eq.s32.totalorder %s13, 1
    %p56 = por %p54, %p55
    %p57 = scmp.ne.s32.totalorder %s49, %s52
    %p58 = scmp.eq.s32.totalorder %s13, 0
    %p59 = por %p57, %p58
    %p60 = scmp.ne.s32.totalorder %s49, %s52
    %p61 = scmp.eq.s32.totalorder %s18, 1
    %p62 = por %p60, %p61
    %p63 = scmp.ne.s32.totalorder %s52, %s53
    %p64 = scmp.eq.s32.totalorder %s18, 0
    %p65 = por %p63, %p64
    %p66 = scmp.ne.s32.totalorder %s52, %s53
    %p67 = scmp.eq.s32.totalorder %s19, 1
    %p68 = por %p66, %p67
    %p70 = scmp.ne.s32.totalorder %s53, %s69
    %p71 = scmp.eq.s32.totalorder %s19, 0
    %p72 = por %p70, %p71
    %s73 = ssub.s32 %s13, %s20
    %p74 = scmp.eq.s32.totalorder %s73, 0
    %s76 = sadd.s32 %s75, 1
    %s77 = scalar_select %p74, %s75, %s76
    %p80 = pneg %p74
    %p81 = scmp.eq.s32.totalorder %s13, 1
    %p82 = por %p80, %p81
    %p83 = scmp.ne.s32.totalorder %s75, %s78
    %p84 = scmp.eq.s32.totalorder %s13, 0
    %p85 = por %p83, %p84
    %p86 = scmp.ne.s32.totalorder %s75, %s78
    %p87 = scmp.eq.s32.totalorder %s18, 1
    %p88 = por %p86, %p87
    %p89 = scmp.ne.s32.totalorder %s78, %s79
    %p90 = scmp.eq.s32.totalorder %s18, 0
    %p91 = por %p89, %p90
    %p92 = scmp.ne.s32.totalorder %s78, %s79
    %p93 = scmp.eq.s32.totalorder %s19, 1
    %p94 = por %p92, %p93
    %p96 = scmp.ne.s32.totalorder %s79, %s95
    %p97 = scmp.eq.s32.totalorder %s19, 0
    %p98 = por %p96, %p97
    %s99 = ssub.s32 %s13, %s20
    %p100 = scmp.eq.s32.totalorder %s99, 0
    %s102 = sadd.s32 %s101, 1
    %s103 = scalar_select %p100, %s101, %s102
    %p106 = pneg %p100
    %p107 = scmp.eq.s32.totalorder %s13, 1
    %p108 = por %p106, %p107
    %p109 = scmp.ne.s32.totalorder %s101, %s104
    %p110 = scmp.eq.s32.totalorder %s13, 0
    %p111 = por %p109, %p110
    %p112 = scmp.ne.s32.totalorder %s101, %s104
    %p113 = scmp.eq.s32.totalorder %s18, 1
    %p114 = por %p112, %p113
    %p115 = scmp.ne.s32.totalorder %s104, %s105
    %p116 = scmp.eq.s32.totalorder %s18, 0
    %p117 = por %p115, %p116
    %p118 = scmp.ne.s32.totalorder %s104, %s105
    %p119 = scmp.eq.s32.totalorder %s19, 1
    %p120 = por %p118, %p119
    %p122 = scmp.ne.s32.totalorder %s105, %s121
    %p123 = scmp.eq.s32.totalorder %s19, 0
    %p124 = por %p122, %p123
    %s126 = sadd.s32 %s125, 1
    %p129 = scmp.eq.s32.totalorder %s13, 1
    %p130 = scmp.ne.s32.totalorder %s125, %s127
    %p131 = scmp.eq.s32.totalorder %s13, 0
    %p132 = por %p130, %p131
    %p133 = scmp.ne.s32.totalorder %s125, %s127
    %p134 = scmp.eq.s32.totalorder %s18, 1
    %p135 = por %p133, %p134
    %p136 = scmp.ne.s32.totalorder %s127, %s128
    %p137 = scmp.eq.s32.totalorder %s18, 0
    %p138 = por %p136, %p137
    %p139 = scmp.ne.s32.totalorder %s127, %s128
    %p140 = scmp.eq.s32.totalorder %s19, 1
    %p141 = por %p139, %p140
    %p143 = scmp.ne.s32.totalorder %s128, %s142
    %p144 = scmp.eq.s32.totalorder %s19, 0
    %p145 = por %p143, %p144
    %s147 = sadd.s32 %s146, 1
    %p150 = scmp.eq.s32.totalorder %s13, 1
    %p151 = scmp.ne.s32.totalorder %s146, %s148
    %p152 = scmp.eq.s32.totalorder %s13, 0
    %p153 = por %p151, %p152
    %p154 = scmp.ne.s32.totalorder %s146, %s148
    %p155 = scmp.eq.s32.totalorder %s18, 1
    %p156 = por %p154, %p155
    %p157 = scmp.ne.s32.totalorder %s148, %s149
    %p158 = scmp.eq.s32.totalorder %s18, 0
    %p159 = por %p157, %p158
    %p160 = scmp.ne.s32.totalorder %s148, %s149
    %p161 = scmp.eq.s32.totalorder %s19, 1
    %p162 = por %p160, %p161
    %p164 = scmp.ne.s32.totalorder %s149, %s163
    %p165 = scmp.eq.s32.totalorder %s19, 0
    %p166 = por %p164, %p165
    %s168 = sadd.s32 %s167, 1
    %p171 = scmp.eq.s32.totalorder %s13, 1
    %p172 = scmp.ne.s32.totalorder %s167, %s169
    %p173 = scmp.eq.s32.totalorder %s13, 0
    %p174 = por %p172, %p173
    %p175 = scmp.ne.s32.totalorder %s167, %s169
    %p176 = scmp.eq.s32.totalorder %s18, 1
    %p177 = por %p175, %p176
    %p178 = scmp.ne.s32.totalorder %s169, %s170
    %p179 = scmp.eq.s32.totalorder %s18, 0
    %p180 = por %p178, %p179
    %p181 = scmp.ne.s32.totalorder %s169, %s170
    %p182 = scmp.eq.s32.totalorder %s19, 1
    %p183 = por %p181, %p182
    %p185 = scmp.ne.s32.totalorder %s170, %s184
    %p186 = scmp.eq.s32.totalorder %s19, 0
    %p187 = por %p185, %p186
    %p188 = scmp.le.s32.totalorder 1, %s13
    %p189 = scmp.lt.s32.totalorder %s13, 3
    %p190 = pnand %p188, %p189
    %p191 = pneg %p190
    // Predicated region
    $region9: #{basic_gru_forward.1} parent=5 // pred_check
      _
    $region10: #{basic_gru_forward.1} parent=5 // pred_check_branch
      %193 = sbr.rel (%p190) target = $region12
    $region11: #{basic_gru_forward.1} parent=5 // pred_region
      %s194 = ssub.s32 %s13, 1
      // Predicated region
      $region13: #{basic_gru_forward.1} parent=11 // pred_check
        %p195 = pneg %p138
      $region14: #{basic_gru_forward.1} parent=11 // pred_check_branch
        %197 = sbr.rel (%p195) target = $region16
      $region15: #{basic_gru_forward.1} parent=11 // pred_region
        _
      $region16: #{basic_gru_forward.1} parent=11 // pred_fallthru
        _
      // Predicated region
      $region17: #{basic_gru_forward.1} parent=11 // pred_check
        %p198 = pneg %p159
      $region18: #{basic_gru_forward.1} parent=11 // pred_check_branch
        %200 = sbr.rel (%p198) target = $region20
      $region19: #{basic_gru_forward.1} parent=11 // pred_region
        _
      $region20: #{basic_gru_forward.1} parent=11 // pred_fallthru
        _
    $region12: #{basic_gru_forward.1} parent=5 // pred_fallthru
      _
    %p201 = scmp.lt.s32.totalorder %s13, 2
    // Predicated region
    $region21: #{basic_gru_forward.1} parent=5 // pred_check
      %p202 = pneg %p201
    $region22: #{basic_gru_forward.1} parent=5 // pred_check_branch
      %204 = sbr.rel (%p202) target = $region24
    $region23: #{basic_gru_forward.1} parent=5 // pred_region
      // Predicated region
      $region25: #{basic_gru_forward.1} parent=23 // pred_check
        %p205 = pneg %p33
      $region26: #{basic_gru_forward.1} parent=23 // pred_check_branch
        %207 = sbr.rel (%p205) target = $region28
      $region27: #{basic_gru_forward.1} parent=23 // pred_region
        %p208 = scmp.lt.s32.totalorder %s13, 1
        %s209 = scalar_select %p208, %s13, 1
        %s210 = smul.addr %s209, 48
        %s211 = smul.addr %s210, 4
        %s212 = scalar_lea.vmem %s1, %s211
      $region28: #{basic_gru_forward.1} parent=23 // pred_fallthru
        _
      // Predicated region
      $region29: #{basic_gru_forward.1} parent=23 // pred_check
        %p213 = pneg %p59
      $region30: #{basic_gru_forward.1} parent=23 // pred_check_branch
        %215 = sbr.rel (%p213) target = $region32
      $region31: #{basic_gru_forward.1} parent=23 // pred_region
        %p216 = scmp.lt.s32.totalorder %s13, 1
        %s217 = scalar_select %p216, %s13, 1
        %s218 = smul.addr %s217, 48
        %s219 = smul.addr %s218, 4
        %s220 = scalar_lea.vmem %s2, %s219
      $region32: #{basic_gru_forward.1} parent=23 // pred_fallthru
        _
      // Predicated region
      $region33: #{basic_gru_forward.1} parent=23 // pred_check
        %p221 = pneg %p85
      $region34: #{basic_gru_forward.1} parent=23 // pred_check_branch
        %223 = sbr.rel (%p221) target = $region36
      $region35: #{basic_gru_forward.1} parent=23 // pred_region
        %p224 = scmp.lt.s32.totalorder %s13, 1
        %s225 = scalar_select %p224, %s13, 1
        %s226 = smul.addr %s225, 3
        %s227 = scalar_lea.vmem %s3, %s226
      $region36: #{basic_gru_forward.1} parent=23 // pred_fallthru
        _
      // Predicated region
      $region37: #{basic_gru_forward.1} parent=23 // pred_check
        %p228 = pneg %p111
      $region38: #{basic_gru_forward.1} parent=23 // pred_check_branch
        %230 = sbr.rel (%p228) target = $region40
      $region39: #{basic_gru_forward.1} parent=23 // pred_region
        %p231 = scmp.lt.s32.totalorder %s13, 1
        %s232 = scalar_select %p231, %s13, 1
        %s233 = scalar_lea.vmem %s4, %s232
      $region40: #{basic_gru_forward.1} parent=23 // pred_fallthru
        _
    $region24: #{basic_gru_forward.1} parent=5 // pred_fallthru
      _
    %p234 = scmp.le.s32.totalorder 1, %s13
    %p235 = scmp.lt.s32.totalorder %s13, 3
    %p236 = pnand %p234, %p235
    %p237 = pneg %p236
    // Predicated region
    $region41: #{basic_gru_forward.1} parent=5 // pred_check
      _
    $region42: #{basic_gru_forward.1} parent=5 // pred_check_branch
      %239 = sbr.rel (%p236) target = $region44
    $region43: #{basic_gru_forward.1} parent=5 // pred_region
      %s240 = ssub.s32 %s13, 1
      %p241 = scmp.lt.s32.totalorder %s18, 1
      %s242 = scalar_select %p241, %s18, 1
      %s243 = smul.addr %s242, 48
      %s244 = smul.addr %s243, 4
      %s245 = scalar_lea.vmem %s1, %s244
      %p246 = pneg %p39
      %p247 = pneg %p36
      %p248 = scmp.lt.s32.totalorder %s18, 1
      %s249 = scalar_select %p248, %s18, 1
      %s250 = smul.addr %s249, 48
      %s251 = smul.addr %s250, 4
      %s252 = scalar_lea.vmem %s2, %s251
      %p253 = pneg %p65
      %p254 = pneg %p62
      %p255 = scmp.lt.s32.totalorder %s18, 1
      %s256 = scalar_select %p255, %s18, 1
      %s257 = smul.addr %s256, 3
      %s258 = scalar_lea.vmem %s3, %s257
      %p259 = pneg %p91
      %p260 = pneg %p88
      %p261 = scmp.lt.s32.totalorder %s18, 1
      %s262 = scalar_select %p261, %s18, 1
      %s263 = scalar_lea.vmem %s4, %s262
      %p264 = pneg %p117
      %p265 = pneg %p114
      %p266 = pneg %p138
      %p267 = pneg %p135
      %p268 = pneg %p159
      %p269 = pneg %p156
      %p270 = pneg %p180
      %p271 = pneg %p177
      %p272 = scmp.lt.s32.totalorder %s18, 1
      %s273 = scalar_select %p272, %s18, 1
      %s274 = smul.addr %s273, 48
      %s275 = smul.addr %s274, 4
      %s276 = scalar_lea.vmem %s1, %s275
      %p277 = scmp.lt.s32.totalorder %s18, 1
      %s278 = scalar_select %p277, %s18, 1
      %s279 = smul.addr %s278, 48
      %s280 = smul.addr %s279, 4
      %s281 = scalar_lea.vmem %s2, %s280
      %p282 = scmp.lt.s32.totalorder %s18, 1
      %s283 = scalar_select %p282, %s18, 1
      %s284 = smul.addr %s283, 3
      %s285 = scalar_lea.vmem %s3, %s284
      %p286 = scmp.lt.s32.totalorder %s18, 1
      %s287 = scalar_select %p286, %s18, 1
      %s288 = scalar_lea.vmem %s4, %s287
      %p290 = scmp.eq.s32.totalorder %s18, 1
      %p291 = scmp.lt.s32.totalorder %s18, 1
      %p292 = scmp.eq.s32.totalorder %s18, 0
      // Predicated region
      $region45: #{basic_gru_forward.1} parent=43 // pred_check
        %p293 = pneg %p292
      $region46: #{basic_gru_forward.1} parent=43 // pred_check_branch
        %295 = sbr.rel (%p293) target = $region48
      $region47: #{basic_gru_forward.1} parent=43 // pred_region
        // Predicated region
        $region49: #{basic_gru_forward.1} parent=47 // pred_check
          _
        $region50: #{basic_gru_forward.1} parent=47 // pred_check_branch
          %297 = sbr.rel (0) target = $region52
        $region51: #{basic_gru_forward.1} parent=47 // pred_region
          loop: start=0, step=1, limit=1
          $region53: #{basic_gru_forward.1} parent=51 // loop_pre_header
            _
          $region54: #{basic_gru_forward.1} parent=51 // loop_header
            %s299 = sphi 0, %s303
            %p300 = scmp.ge.s32.totalorder %s299, 1
            %s304 = sphi %s0, %s0
            %s305 = sphi [#allocation2], [#allocation2]
          $region55: #{basic_gru_forward.1} parent=51 // loop_header_branch
            %302 = sbr.rel (%p300) target = $region59
          $region56: #{basic_gru_forward.1} parent=51 // loop_body
            %v306 = vld [vmem:[%s304] sm:$0xff]
            %307 = vst [vmem:[%s305] sm:$0xff] %v306
            %v308 = vld [vmem:[%s304 + $0x8] sm:$0xff]
            %309 = vst [vmem:[%s305 + $0x8] sm:$0xff] %v308
            %v310 = vld [vmem:[%s304 + $0x10] sm:$0xff]
            %311 = vst [vmem:[%s305 + $0x10] sm:$0xff] %v310
            %v312 = vld [vmem:[%s304 + $0x18] sm:$0xff]
            %313 = vst [vmem:[%s305 + $0x18] sm:$0xff] %v312
            %v314 = vld [vmem:[%s304 + $0x20] sm:$0xff]
            %315 = vst [vmem:[%s305 + $0x20] sm:$0xff] %v314
            %v316 = vld [vmem:[%s304 + $0x28] sm:$0xff]
            %317 = vst [vmem:[%s305 + $0x28] sm:$0xff] %v316
            %v318 = vld [vmem:[%s304 + $0x30] sm:$0xff]
            %319 = vst [vmem:[%s305 + $0x30] sm:$0xff] %v318
            %v320 = vld [vmem:[%s304 + $0x38] sm:$0xff]
            %321 = vst [vmem:[%s305 + $0x38] sm:$0xff] %v320
          $region57: #{basic_gru_forward.1} parent=51 // loop_footer
            %s303 = sadd.s32 1, %s299
          $region58: #{basic_gru_forward.1} parent=51 // loop_footer_branch
            %298 = sbr.rel target = $region54
          $region59: #{basic_gru_forward.1} parent=51 // loop_exit
            _
        $region52: #{basic_gru_forward.1} parent=47 // pred_fallthru
          _
        // Predicated region
        $region60: #{basic_gru_forward.1} parent=47 // pred_check
          _
        $region61: #{basic_gru_forward.1} parent=47 // pred_check_branch
          %323 = sbr.rel target = $region63
        $region62: #{basic_gru_forward.1} parent=47 // pred_region
          _
        $region63: #{basic_gru_forward.1} parent=47 // pred_fallthru
          _
        // Predicated region
        $region64: #{basic_gru_forward.1} parent=47 // pred_check
          _
        $region65: #{basic_gru_forward.1} parent=47 // pred_check_branch
          %326 = sbr.rel (0) target = $region67
        $region66: #{basic_gru_forward.1} parent=47 // pred_region
          %327 = vsyncadd [#allocation5], 1024
        $region67: #{basic_gru_forward.1} parent=47 // pred_fallthru
          _
        %s328 = smul.u32 64, 1
        %s329 = sshll.u32 %s328, 4
        %330 = dma.done [#allocation5], %s329
      $region48: #{basic_gru_forward.1} parent=43 // pred_fallthru
        _
      %v331 = vld [vmem:[%s276] sm:$0xff]
      %v332 = vld [vmem:[%s276 + $0x8] sm:$0xf]
      %v333 = vld [vmem:[%s276 + $0xc] sm:$0xff]
      %v334 = vld [vmem:[%s276 + $0x14] sm:$0xf]
      %v335 = vld [vmem:[%s276 + $0x18] sm:$0xff]
      %v336 = vld [vmem:[%s276 + $0x20] sm:$0xf]
      %v337 = vld [vmem:[%s276 + $0x24] sm:$0xff]
      %v338 = vld [vmem:[%s276 + $0x2c] sm:$0xf]
      %v339 = vld [vmem:[%s276 + $0x30] sm:$0xff]
      %v340 = vld [vmem:[%s276 + $0x38] sm:$0xf]
      %v341 = vld [vmem:[%s276 + $0x3c] sm:$0xff]
      %v342 = vld [vmem:[%s276 + $0x44] sm:$0xf]
      %v343 = vld [vmem:[%s276 + $0x48] sm:$0xff]
      %v344 = vld [vmem:[%s276 + $0x50] sm:$0xf]
      %v345 = vld [vmem:[%s276 + $0x54] sm:$0xff]
      %v346 = vld [vmem:[%s276 + $0x5c] sm:$0xf]
      %v347 = vld [vmem:[%s276 + $0x60] sm:$0xff]
      %v348 = vld [vmem:[%s276 + $0x68] sm:$0xf]
      %v349 = vld [vmem:[%s276 + $0x6c] sm:$0xff]
      %v350 = vld [vmem:[%s276 + $0x74] sm:$0xf]
      %v351 = vld [vmem:[%s276 + $0x78] sm:$0xff]
      %v352 = vld [vmem:[%s276 + $0x80] sm:$0xf]
      %v353 = vld [vmem:[%s276 + $0x84] sm:$0xff]
      %v354 = vld [vmem:[%s276 + $0x8c] sm:$0xf]
      %v355 = vld [vmem:[%s276 + $0x90] sm:$0xff]
      %v356 = vld [vmem:[%s276 + $0x98] sm:$0xf]
      %v357 = vld [vmem:[%s276 + $0x9c] sm:$0xff]
      %v358 = vld [vmem:[%s276 + $0xa4] sm:$0xf]
      %v359 = vld [vmem:[%s276 + $0xa8] sm:$0xff]
      %v360 = vld [vmem:[%s276 + $0xb0] sm:$0xf]
      %v361 = vld [vmem:[%s276 + $0xb4] sm:$0xff]
      %v362 = vld [vmem:[%s276 + $0xbc] sm:$0xf]
      %v363 = vld [vmem:[%s281] sm:$0xff]
      %v364 = vld [vmem:[%s281 + $0x8] sm:$0xf]
      %v365 = vld [vmem:[%s281 + $0xc] sm:$0xff]
      %v366 = vld [vmem:[%s281 + $0x14] sm:$0xf]
      %v367 = vld [vmem:[%s281 + $0x18] sm:$0xff]
      %v368 = vld [vmem:[%s281 + $0x20] sm:$0xf]
      %v369 = vld [vmem:[%s281 + $0x24] sm:$0xff]
      %v370 = vld [vmem:[%s281 + $0x2c] sm:$0xf]
      %v371 = vld [vmem:[%s281 + $0x30] sm:$0xff]
      %v372 = vld [vmem:[%s281 + $0x38] sm:$0xf]
      %v373 = vld [vmem:[%s281 + $0x3c] sm:$0xff]
      %v374 = vld [vmem:[%s281 + $0x44] sm:$0xf]
      %v375 = vld [vmem:[%s281 + $0x48] sm:$0xff]
      %v376 = vld [vmem:[%s281 + $0x50] sm:$0xf]
      %v377 = vld [vmem:[%s281 + $0x54] sm:$0xff]
      %v378 = vld [vmem:[%s281 + $0x5c] sm:$0xf]
      %v379 = vld [vmem:[%s281 + $0x60] sm:$0xff]
      %v380 = vld [vmem:[%s281 + $0x68] sm:$0xf]
      %v381 = vld [vmem:[%s281 + $0x6c] sm:$0xff]
      %v382 = vld [vmem:[%s281 + $0x74] sm:$0xf]
      %v383 = vld [vmem:[%s281 + $0x78] sm:$0xff]
      %v384 = vld [vmem:[%s281 + $0x80] sm:$0xf]
      %v385 = vld [vmem:[%s281 + $0x84] sm:$0xff]
      %v386 = vld [vmem:[%s281 + $0x8c] sm:$0xf]
      %v387 = vld [vmem:[%s281 + $0x90] sm:$0xff]
      %v388 = vld [vmem:[%s281 + $0x98] sm:$0xf]
      %v389 = vld [vmem:[%s281 + $0x9c] sm:$0xff]
      %v390 = vld [vmem:[%s281 + $0xa4] sm:$0xf]
      %v391 = vld [vmem:[%s281 + $0xa8] sm:$0xff]
      %v392 = vld [vmem:[%s281 + $0xb0] sm:$0xf]
      %v393 = vld [vmem:[%s281 + $0xb4] sm:$0xff]
      %v394 = vld [vmem:[%s281 + $0xbc] sm:$0xf]
      %v395 = vld [vmem:[%s285] sm:$0x7]
      %v396 = vld [vmem:[%s288] sm:$0x1]
      %v398 = vperm.slane %v396, 0
      %v400 = vld [vmem:[#allocation2] sm:$0xff]
      %v401 = vld [vmem:[#allocation2 + $0x8] sm:$0xff]
      %v402 = vld [vmem:[#allocation2 + $0x10] sm:$0xff]
      %v403 = vld [vmem:[#allocation2 + $0x18] sm:$0xff]
      %v404 = vld [vmem:[#allocation2 + $0x20] sm:$0xff]
      %v405 = vld [vmem:[#allocation2 + $0x28] sm:$0xff]
      %v406 = vld [vmem:[#allocation2 + $0x30] sm:$0xff]
      %v407 = vld [vmem:[#allocation2 + $0x38] sm:$0xff]
      %v408 = vpack.c.bf16 %v401, %v400
      %v409 = vpack.c.bf16 %v403, %v402
      %v410 = vpack.c.bf16 %v405, %v404
      %v411 = vpack.c.bf16 %v407, %v406
      %v413 = vperm.slane %v395, 0
      %v414 = vperm.slane %v395, 1
      %v415 = vperm.slane %v395, 2
      %v451 = vunpack.c.l.b16 %v331
      %v452 = vunpack.c.h.b16 %v331
      %v453 = vunpack.c.l.b16 %v332
      %v454 = vunpack.c.l.b16 %v333
      %v455 = vunpack.c.h.b16 %v333
      %v456 = vunpack.c.l.b16 %v334
      %v457 = vunpack.c.l.b16 %v335
      %v458 = vunpack.c.h.b16 %v335
      %v459 = vunpack.c.l.b16 %v336
      %v460 = vunpack.c.l.b16 %v337
      %v461 = vunpack.c.h.b16 %v337
      %v462 = vunpack.c.l.b16 %v338
      %v463 = vunpack.c.l.b16 %v339
      %v464 = vunpack.c.h.b16 %v339
      %v465 = vunpack.c.l.b16 %v340
      %v466 = vunpack.c.l.b16 %v341
      %v467 = vunpack.c.h.b16 %v341
      %v468 = vunpack.c.l.b16 %v342
      %v469 = vunpack.c.l.b16 %v343
      %v470 = vunpack.c.h.b16 %v343
      %v471 = vunpack.c.l.b16 %v344
      %v472 = vunpack.c.l.b16 %v345
      %v473 = vunpack.c.h.b16 %v345
      %v474 = vunpack.c.l.b16 %v346
      %v475 = vunpack.c.l.b16 %v347
      %v476 = vunpack.c.h.b16 %v347
      %v477 = vunpack.c.l.b16 %v348
      %v478 = vunpack.c.l.b16 %v349
      %v479 = vunpack.c.h.b16 %v349
      %v480 = vunpack.c.l.b16 %v350
      %v481 = vunpack.c.l.b16 %v351
      %v482 = vunpack.c.h.b16 %v351
      %v483 = vunpack.c.l.b16 %v352
      %v484 = vunpack.c.l.b16 %v353
      %v485 = vunpack.c.h.b16 %v353
      %v486 = vunpack.c.l.b16 %v354
      %v487 = vunpack.c.l.b16 %v355
      %v488 = vunpack.c.h.b16 %v355
      %v489 = vunpack.c.l.b16 %v356
      %v490 = vunpack.c.l.b16 %v357
      %v491 = vunpack.c.h.b16 %v357
      %v492 = vunpack.c.l.b16 %v358
      %v493 = vunpack.c.l.b16 %v359
      %v494 = vunpack.c.h.b16 %v359
      %v495 = vunpack.c.l.b16 %v360
      %v496 = vunpack.c.l.b16 %v361
      %v497 = vunpack.c.h.b16 %v361
      %v498 = vunpack.c.l.b16 %v362
      %v499 = vpack.c.b16 %v454, %v451
      %v500 = vpack.c.b16 %v455, %v452
      %v501 = vpack.c.b16 %v456, %v453
      %v502 = vpack.c.b16 %v460, %v457
      %v503 = vpack.c.b16 %v461, %v458
      %v504 = vpack.c.b16 %v462, %v459
      %v505 = vpack.c.b16 %v466, %v463
      %v506 = vpack.c.b16 %v467, %v464
      %v507 = vpack.c.b16 %v468, %v465
      %v508 = vpack.c.b16 %v472, %v469
      %v509 = vpack.c.b16 %v473, %v470
      %v510 = vpack.c.b16 %v474, %v471
      %v511 = vpack.c.b16 %v478, %v475
      %v512 = vpack.c.b16 %v479, %v476
      %v513 = vpack.c.b16 %v480, %v477
      %v514 = vpack.c.b16 %v484, %v481
      %v515 = vpack.c.b16 %v485, %v482
      %v516 = vpack.c.b16 %v486, %v483
      %v517 = vpack.c.b16 %v490, %v487
      %v518 = vpack.c.b16 %v491, %v488
      %v519 = vpack.c.b16 %v492, %v489
      %v520 = vpack.c.b16 %v496, %v493
      %v521 = vpack.c.b16 %v497, %v494
      %v522 = vpack.c.b16 %v498, %v495
      %547 = vmatpush.bf16.msra.mxu0 %v520
      %548 = vmatpush.bf16.msra.mxu0 %v517
      %549 = vmatpush.bf16.msra.mxu0 %v514
      %550 = vmatpush.bf16.msra.mxu0 %v511
      %551 = vmatpush.bf16.msra.mxu0 %v508
      %552 = vmatpush.bf16.msra.mxu0 %v505
      %553 = vmatpush.bf16.msra.mxu0 %v502
      %554 = vmatpush.bf16.msra.mxu0 %v499
      %555 = vmatmul.bf16.gmra.mxu0 %v408
      %v556 = vpop.f32.mrf.mxu0
      %v557 = vadd.f32 %v413, %v556
      %v558 = vpop.f32.mrf.mxu0
      %v559 = vadd.f32 %v413, %v558
      %560 = vmatmul.bf16.gmra.mxu0 %v409
      %v561 = vpop.f32.mrf.mxu0
      %v562 = vadd.f32 %v413, %v561
      %v563 = vpop.f32.mrf.mxu0
      %v564 = vadd.f32 %v413, %v563
      %565 = vmatmul.bf16.gmra.mxu0 %v410
      %v566 = vpop.f32.mrf.mxu0
      %v567 = vadd.f32 %v413, %v566
      %v568 = vpop.f32.mrf.mxu0
      %v569 = vadd.f32 %v413, %v568
      %570 = vmatmul.bf16.gmra.mxu0 %v411
      %v571 = vpop.f32.mrf.mxu0
      %v572 = vadd.f32 %v413, %v571
      %v573 = vpop.f32.mrf.mxu0
      %v574 = vadd.f32 %v413, %v573
      %575 = vdwg.mxu0
      %576 = vmatpush.bf16.msra.mxu0 %v521
      %577 = vmatpush.bf16.msra.mxu0 %v518
      %578 = vmatpush.bf16.msra.mxu0 %v515
      %579 = vmatpush.bf16.msra.mxu0 %v512
      %580 = vmatpush.bf16.msra.mxu0 %v509
      %581 = vmatpush.bf16.msra.mxu0 %v506
      %582 = vmatpush.bf16.msra.mxu0 %v503
      %583 = vmatpush.bf16.msra.mxu0 %v500
      %584 = vmatmul.bf16.gmra.mxu0 %v408
      %v585 = vpop.f32.mrf.mxu0
      %v586 = vadd.f32 %v414, %v585
      %v587 = vpop.f32.mrf.mxu0
      %v588 = vadd.f32 %v414, %v587
      %589 = vmatmul.bf16.gmra.mxu0 %v409
      %v590 = vpop.f32.mrf.mxu0
      %v591 = vadd.f32 %v414, %v590
      %v592 = vpop.f32.mrf.mxu0
      %v593 = vadd.f32 %v414, %v592
      %594 = vmatmul.bf16.gmra.mxu0 %v410
      %v595 = vpop.f32.mrf.mxu0
      %v596 = vadd.f32 %v414, %v595
      %v597 = vpop.f32.mrf.mxu0
      %v598 = vadd.f32 %v414, %v597
      %599 = vmatmul.bf16.gmra.mxu0 %v411
      %v600 = vpop.f32.mrf.mxu0
      %v601 = vadd.f32 %v414, %v600
      %v602 = vpop.f32.mrf.mxu0
      %v603 = vadd.f32 %v414, %v602
      %604 = vdwg.mxu0
      %605 = vmatpush.bf16.msra.mxu0 %v522
      %606 = vmatpush.bf16.msra.mxu0 %v519
      %607 = vmatpush.bf16.msra.mxu0 %v516
      %608 = vmatpush.bf16.msra.mxu0 %v513
      %609 = vmatpush.bf16.msra.mxu0 %v510
      %610 = vmatpush.bf16.msra.mxu0 %v507
      %611 = vmatpush.bf16.msra.mxu0 %v504
      %612 = vmatpush.bf16.msra.mxu0 %v501
      %613 = vmatmul.bf16.gmra.mxu0 %v408
      %v614 = vpop.f32.mrf.mxu0
      %v615 = vadd.f32 %v415, %v614
      %v616 = vpop.f32.mrf.mxu0
      %v617 = vadd.f32 %v415, %v616
      %618 = vmatmul.bf16.gmra.mxu0 %v409
      %v619 = vpop.f32.mrf.mxu0
      %v620 = vadd.f32 %v415, %v619
      %v621 = vpop.f32.mrf.mxu0
      %v622 = vadd.f32 %v415, %v621
      %623 = vmatmul.bf16.gmra.mxu0 %v410
      %v624 = vpop.f32.mrf.mxu0
      %v625 = vadd.f32 %v415, %v624
      %v626 = vpop.f32.mrf.mxu0
      %v627 = vadd.f32 %v415, %v626
      %628 = vmatmul.bf16.gmra.mxu0 %v411
      %v629 = vpop.f32.mrf.mxu0
      %v630 = vadd.f32 %v415, %v629
      %v631 = vpop.f32.mrf.mxu0
      %v632 = vadd.f32 %v415, %v631
      %633 = vdwg.mxu0
      %634 = vst [vmem:[#allocation3] sm:$0xff] %v557
      %635 = vst [vmem:[#allocation3 + $0x8] sm:$0xff] %v586
      %636 = vst [vmem:[#allocation3 + $0x10] sm:$0xff] %v615
      %637 = vst [vmem:[#allocation3 + $0x18] sm:$0xff] %v559
      %638 = vst [vmem:[#allocation3 + $0x20] sm:$0xff] %v588
      %639 = vst [vmem:[#allocation3 + $0x28] sm:$0xff] %v617
      %640 = vst [vmem:[#allocation3 + $0x30] sm:$0xff] %v562
      %641 = vst [vmem:[#allocation3 + $0x38] sm:$0xff] %v591
      %642 = vst [vmem:[#allocation3 + $0x40] sm:$0xff] %v620
      %643 = vst [vmem:[#allocation3 + $0x48] sm:$0xff] %v564
      %644 = vst [vmem:[#allocation3 + $0x50] sm:$0xff] %v593
      %645 = vst [vmem:[#allocation3 + $0x58] sm:$0xff] %v622
      %646 = vst [vmem:[#allocation3 + $0x60] sm:$0xff] %v567
      %647 = vst [vmem:[#allocation3 + $0x68] sm:$0xff] %v596
      %648 = vst [vmem:[#allocation3 + $0x70] sm:$0xff] %v625
      %649 = vst [vmem:[#allocation3 + $0x78] sm:$0xff] %v569
      %650 = vst [vmem:[#allocation3 + $0x80] sm:$0xff] %v598
      %651 = vst [vmem:[#allocation3 + $0x88] sm:$0xff] %v627
      %652 = vst [vmem:[#allocation3 + $0x90] sm:$0xff] %v572
      %653 = vst [vmem:[#allocation3 + $0x98] sm:$0xff] %v601
      %654 = vst [vmem:[#allocation3 + $0xa0] sm:$0xff] %v630
      %655 = vst [vmem:[#allocation3 + $0xa8] sm:$0xff] %v574
      %656 = vst [vmem:[#allocation3 + $0xb0] sm:$0xff] %v603
      %657 = vst [vmem:[#allocation3 + $0xb8] sm:$0xff] %v632
      %s658 = smul.u32 0, 3
      %s659 = smul.addr %s658, 8
      %s660 = scalar_lea.vmem [#allocation3], %s659
      %v661 = vld [vmem:[%s660] sm:$0xff]
      %v662 = vld [vmem:[%s660 + $0x8] sm:$0xff]
      %v663 = vld [vmem:[%s660 + $0x10] sm:$0xff]
      %v696 = vunpack.c.l.b16 %v363
      %v697 = vunpack.c.h.b16 %v363
      %v698 = vunpack.c.l.b16 %v364
      %v699 = vunpack.c.l.b16 %v365
      %v700 = vunpack.c.h.b16 %v365
      %v701 = vunpack.c.l.b16 %v366
      %v702 = vunpack.c.l.b16 %v367
      %v703 = vunpack.c.h.b16 %v367
      %v704 = vunpack.c.l.b16 %v368
      %v705 = vunpack.c.l.b16 %v369
      %v706 = vunpack.c.h.b16 %v369
      %v707 = vunpack.c.l.b16 %v370
      %v708 = vunpack.c.l.b16 %v371
      %v709 = vunpack.c.h.b16 %v371
      %v710 = vunpack.c.l.b16 %v372
      %v711 = vunpack.c.l.b16 %v373
      %v712 = vunpack.c.h.b16 %v373
      %v713 = vunpack.c.l.b16 %v374
      %v714 = vunpack.c.l.b16 %v375
      %v715 = vunpack.c.h.b16 %v375
      %v716 = vunpack.c.l.b16 %v376
      %v717 = vunpack.c.l.b16 %v377
      %v718 = vunpack.c.h.b16 %v377
      %v719 = vunpack.c.l.b16 %v378
      %v720 = vunpack.c.l.b16 %v379
      %v721 = vunpack.c.h.b16 %v379
      %v722 = vunpack.c.l.b16 %v380
      %v723 = vunpack.c.l.b16 %v381
      %v724 = vunpack.c.h.b16 %v381
      %v725 = vunpack.c.l.b16 %v382
      %v726 = vunpack.c.l.b16 %v383
      %v727 = vunpack.c.h.b16 %v383
      %v728 = vunpack.c.l.b16 %v384
      %v729 = vunpack.c.l.b16 %v385
      %v730 = vunpack.c.h.b16 %v385
      %v731 = vunpack.c.l.b16 %v386
      %v732 = vunpack.c.l.b16 %v387
      %v733 = vunpack.c.h.b16 %v387
      %v734 = vunpack.c.l.b16 %v388
      %v735 = vunpack.c.l.b16 %v389
      %v736 = vunpack.c.h.b16 %v389
      %v737 = vunpack.c.l.b16 %v390
      %v738 = vunpack.c.l.b16 %v391
      %v739 = vunpack.c.h.b16 %v391
      %v740 = vunpack.c.l.b16 %v392
      %v741 = vunpack.c.l.b16 %v393
      %v742 = vunpack.c.h.b16 %v393
      %v743 = vunpack.c.l.b16 %v394
      %v744 = vpack.c.b16 %v699, %v696
      %v745 = vpack.c.b16 %v700, %v697
      %v746 = vpack.c.b16 %v701, %v698
      %v747 = vpack.c.b16 %v705, %v702
      %v748 = vpack.c.b16 %v706, %v703
      %v749 = vpack.c.b16 %v707, %v704
      %v750 = vpack.c.b16 %v711, %v708
      %v751 = vpack.c.b16 %v712, %v709
      %v752 = vpack.c.b16 %v713, %v710
      %v753 = vpack.c.b16 %v717, %v714
      %v754 = vpack.c.b16 %v718, %v715
      %v755 = vpack.c.b16 %v719, %v716
      %v756 = vpack.c.b16 %v723, %v720
      %v757 = vpack.c.b16 %v724, %v721
      %v758 = vpack.c.b16 %v725, %v722
      %v759 = vpack.c.b16 %v729, %v726
      %v760 = vpack.c.b16 %v730, %v727
      %v761 = vpack.c.b16 %v731, %v728
      %v762 = vpack.c.b16 %v735, %v732
      %v763 = vpack.c.b16 %v736, %v733
      %v764 = vpack.c.b16 %v737, %v734
      %v765 = vpack.c.b16 %v741, %v738
      %v766 = vpack.c.b16 %v742, %v739
      %v767 = vpack.c.b16 %v743, %v740
      %792 = vmatpush.bf16.msra.mxu0 %v765
      %793 = vmatpush.bf16.msra.mxu0 %v762
      %794 = vmatpush.bf16.msra.mxu0 %v759
      %795 = vmatpush.bf16.msra.mxu0 %v756
      %796 = vmatpush.bf16.msra.mxu0 %v753
      %797 = vmatpush.bf16.msra.mxu0 %v750
      %798 = vmatpush.bf16.msra.mxu0 %v747
      %799 = vmatpush.bf16.msra.mxu0 %v744
      %800 = vmatmul.bf16.gmra.mxu0 0
      %v801 = vpop.f32.mrf.mxu0
      %v802 = vadd.f32 0.0, %v801
      %v803 = vpop.f32.mrf.mxu0
      %804 = vdwg.mxu0
      %805 = vmatpush.bf16.msra.mxu0 %v766
      %806 = vmatpush.bf16.msra.mxu0 %v763
      %807 = vmatpush.bf16.msra.mxu0 %v760
      %808 = vmatpush.bf16.msra.mxu0 %v757
      %809 = vmatpush.bf16.msra.mxu0 %v754
      %810 = vmatpush.bf16.msra.mxu0 %v751
      %811 = vmatpush.bf16.msra.mxu0 %v748
      %812 = vmatpush.bf16.msra.mxu0 %v745
      %813 = vmatmul.bf16.gmra.mxu0 0
      %v814 = vpop.f32.mrf.mxu0
      %v815 = vadd.f32 0.0, %v814
      %v816 = vpop.f32.mrf.mxu0
      %817 = vdwg.mxu0
      %818 = vmatpush.bf16.msra.mxu0 %v767
      %819 = vmatpush.bf16.msra.mxu0 %v764
      %820 = vmatpush.bf16.msra.mxu0 %v761
      %821 = vmatpush.bf16.msra.mxu0 %v758
      %822 = vmatpush.bf16.msra.mxu0 %v755
      %823 = vmatpush.bf16.msra.mxu0 %v752
      %824 = vmatpush.bf16.msra.mxu0 %v749
      %825 = vmatpush.bf16.msra.mxu0 %v746
      %826 = vmatmul.bf16.gmra.mxu0 0
      %v827 = vpop.f32.mrf.mxu0
      %v828 = vadd.f32 0.0, %v827
      %v829 = vpop.f32.mrf.mxu0
      %830 = vdwg.mxu0
      %v831 = vadd.f32 %v661, %v802
      %v832 = vxor.u32 %v831, 2147483648
      %v833 = vmul.f32 %v832, 1.442695
      %v834 = vpow.pop %v833
      %v835 = vadd.f32 %v834, 1.0
      %v836 = vrcp.pop %v835
      %v837 = vmul.f32 %v835, %v836
      %v838 = vsub.f32 1.0, %v837
      %v839 = vmul.f32 %v836, %v838
      %v840 = vadd.f32 %v836, %v839
      %vm841 = vweird.f32 %v835
      %vm842 = vweird.f32 %v836
      %vm843 = vmor %vm841, %vm842
      %v844 = vsel %vm843, %v836, %v840
      %v845 = vand.u32 2147483647, %v835
      %vm846 = vcmp.eq.f32.partialorder %v845, 8.507059e+37
      %v847 = vand.u32 %v835, 2147483648
      %v848 = vor.u32 1.1754944e-38, %v847
      %v849 = vsel %vm846, %v848, %v844
      %v850 = vmul.f32 1.0, %v849
      %v851 = vadd.f32 %v662, %v815
      %v852 = vxor.u32 %v851, 2147483648
      %v853 = vmul.f32 %v852, 1.442695
      %v854 = vpow.pop %v853
      %v855 = vadd.f32 %v854, 1.0
      %v856 = vrcp.pop %v855
      %v857 = vmul.f32 %v855, %v856
      %v858 = vsub.f32 1.0, %v857
      %v859 = vmul.f32 %v856, %v858
      %v860 = vadd.f32 %v856, %v859
      %vm861 = vweird.f32 %v855
      %vm862 = vweird.f32 %v856
      %vm863 = vmor %vm861, %vm862
      %v864 = vsel %vm863, %v856, %v860
      %v865 = vand.u32 2147483647, %v855
      %vm866 = vcmp.eq.f32.partialorder %v865, 8.507059e+37
      %v867 = vand.u32 %v855, 2147483648
      %v868 = vor.u32 1.1754944e-38, %v867
      %v869 = vsel %vm866, %v868, %v864
      %v870 = vmul.f32 1.0, %v869
      %v871 = vadd.f32 %v828, %v398
      %v872 = vmul.f32 %v850, %v871
      %v873 = vadd.f32 %v663, %v872
      %v874 = vtanh.pop %v873
      %v875 = vsub.f32 1.0, %v870
      %v876 = vmul.f32 %v875, %v874
      %v877 = vmul.f32 %v870, 0.0
      %v878 = vadd.f32 %v876, %v877
      // Predicated region
      $region68: #{basic_gru_forward.1} parent=43 // pred_check
        %p879 = pneg %p291
      $region69: #{basic_gru_forward.1} parent=43 // pred_check_branch
        %881 = sbr.rel (%p879) target = $region71
      $region70: #{basic_gru_forward.1} parent=43 // pred_region
        %882 = vst [vmem:[#allocation2] sm:$0xff] %v878
      $region71: #{basic_gru_forward.1} parent=43 // pred_fallthru
        _
      %s883 = smul.u32 1, 3
      %s884 = smul.addr %s883, 8
      %s885 = scalar_lea.vmem [#allocation3], %s884
      %v886 = vld [vmem:[%s885] sm:$0xff]
      %v887 = vld [vmem:[%s885 + $0x8] sm:$0xff]
      %v888 = vld [vmem:[%s885 + $0x10] sm:$0xff]
      %v889 = vpack.c.bf16 %v878, %v878
      %890 = vmatpush.bf16.msra.mxu0 %v765
      %891 = vmatpush.bf16.msra.mxu0 %v762
      %892 = vmatpush.bf16.msra.mxu0 %v759
      %893 = vmatpush.bf16.msra.mxu0 %v756
      %894 = vmatpush.bf16.msra.mxu0 %v753
      %895 = vmatpush.bf16.msra.mxu0 %v750
      %896 = vmatpush.bf16.msra.mxu0 %v747
      %897 = vmatpush.bf16.msra.mxu0 %v744
      %898 = vmatmul.bf16.gmra.mxu0 %v889
      %v899 = vpop.f32.mrf.mxu0
      %v900 = vadd.f32 0.0, %v899
      %v901 = vpop.f32.mrf.mxu0
      %902 = vdwg.mxu0
      %903 = vmatpush.bf16.msra.mxu0 %v766
      %904 = vmatpush.bf16.msra.mxu0 %v763
      %905 = vmatpush.bf16.msra.mxu0 %v760
      %906 = vmatpush.bf16.msra.mxu0 %v757
      %907 = vmatpush.bf16.msra.mxu0 %v754
      %908 = vmatpush.bf16.msra.mxu0 %v751
      %909 = vmatpush.bf16.msra.mxu0 %v748
      %910 = vmatpush.bf16.msra.mxu0 %v745
      %911 = vmatmul.bf16.gmra.mxu0 %v889
      %v912 = vpop.f32.mrf.mxu0
      %v913 = vadd.f32 0.0, %v912
      %v914 = vpop.f32.mrf.mxu0
      %915 = vdwg.mxu0
      %916 = vmatpush.bf16.msra.mxu0 %v767
      %917 = vmatpush.bf16.msra.mxu0 %v764
      %918 = vmatpush.bf16.msra.mxu0 %v761
      %919 = vmatpush.bf16.msra.mxu0 %v758
      %920 = vmatpush.bf16.msra.mxu0 %v755
      %921 = vmatpush.bf16.msra.mxu0 %v752
      %922 = vmatpush.bf16.msra.mxu0 %v749
      %923 = vmatpush.bf16.msra.mxu0 %v746
      %924 = vmatmul.bf16.gmra.mxu0 %v889
      %v925 = vpop.f32.mrf.mxu0
      %v926 = vadd.f32 0.0, %v925
      %v927 = vpop.f32.mrf.mxu0
      %928 = vdwg.mxu0
      %v929 = vadd.f32 %v886, %v900
      %v930 = vxor.u32 %v929, 2147483648
      %v931 = vmul.f32 %v930, 1.442695
      %v932 = vpow.pop %v931
      %v933 = vadd.f32 %v932, 1.0
      %v934 = vrcp.pop %v933
      %v935 = vmul.f32 %v933, %v934
      %v936 = vsub.f32 1.0, %v935
      %v937 = vmul.f32 %v934, %v936
      %v938 = vadd.f32 %v934, %v937
      %vm939 = vweird.f32 %v933
      %vm940 = vweird.f32 %v934
      %vm941 = vmor %vm939, %vm940
      %v942 = vsel %vm941, %v934, %v938
      %v943 = vand.u32 2147483647, %v933
      %vm944 = vcmp.eq.f32.partialorder %v943, 8.507059e+37
      %v945 = vand.u32 %v933, 2147483648
      %v946 = vor.u32 1.1754944e-38, %v945
      %v947 = vsel %vm944, %v946, %v942
      %v948 = vmul.f32 1.0, %v947
      %v949 = vadd.f32 %v887, %v913
      %v950 = vxor.u32 %v949, 2147483648
      %v951 = vmul.f32 %v950, 1.442695
      %v952 = vpow.pop %v951
      %v953 = vadd.f32 %v952, 1.0
      %v954 = vrcp.pop %v953
      %v955 = vmul.f32 %v953, %v954
      %v956 = vsub.f32 1.0, %v955
      %v957 = vmul.f32 %v954, %v956
      %v958 = vadd.f32 %v954, %v957
      %vm959 = vweird.f32 %v953
      %vm960 = vweird.f32 %v954
      %vm961 = vmor %vm959, %vm960
      %v962 = vsel %vm961, %v954, %v958
      %v963 = vand.u32 2147483647, %v953
      %vm964 = vcmp.eq.f32.partialorder %v963, 8.507059e+37
      %v965 = vand.u32 %v953, 2147483648
      %v966 = vor.u32 1.1754944e-38, %v965
      %v967 = vsel %vm964, %v966, %v962
      %v968 = vmul.f32 1.0, %v967
      %v969 = vadd.f32 %v926, %v398
      %v970 = vmul.f32 %v948, %v969
      %v971 = vadd.f32 %v888, %v970
      %v972 = vtanh.pop %v971
      %v973 = vsub.f32 1.0, %v968
      %v974 = vmul.f32 %v973, %v972
      %v975 = vmul.f32 %v968, %v878
      %v976 = vadd.f32 %v974, %v975
      // Predicated region
      $region72: #{basic_gru_forward.1} parent=43 // pred_check
        %p977 = pneg %p291
      $region73: #{basic_gru_forward.1} parent=43 // pred_check_branch
        %979 = sbr.rel (%p977) target = $region75
      $region74: #{basic_gru_forward.1} parent=43 // pred_region
        %s980 = sadd.s32 0, 8
        %s981 = scalar_lea.vmem [#allocation2], %s980
        %982 = vst [vmem:[%s981] sm:$0xff] %v976
      $region75: #{basic_gru_forward.1} parent=43 // pred_fallthru
        _
      %s983 = smul.u32 2, 3
      %s984 = smul.addr %s983, 8
      %s985 = scalar_lea.vmem [#allocation3], %s984
      %v986 = vld [vmem:[%s985] sm:$0xff]
      %v987 = vld [vmem:[%s985 + $0x8] sm:$0xff]
      %v988 = vld [vmem:[%s985 + $0x10] sm:$0xff]
      %v989 = vpack.c.bf16 %v976, %v976
      %990 = vmatpush.bf16.msra.mxu0 %v765
      %991 = vmatpush.bf16.msra.mxu0 %v762
      %992 = vmatpush.bf16.msra.mxu0 %v759
      %993 = vmatpush.bf16.msra.mxu0 %v756
      %994 = vmatpush.bf16.msra.mxu0 %v753
      %995 = vmatpush.bf16.msra.mxu0 %v750
      %996 = vmatpush.bf16.msra.mxu0 %v747
      %997 = vmatpush.bf16.msra.mxu0 %v744
      %998 = vmatmul.bf16.gmra.mxu0 %v989
      %v999 = vpop.f32.mrf.mxu0
      %v1000 = vadd.f32 0.0, %v999
      %v1001 = vpop.f32.mrf.mxu0
      %1002 = vdwg.mxu0
      %1003 = vmatpush.bf16.msra.mxu0 %v766
      %1004 = vmatpush.bf16.msra.mxu0 %v763
      %1005 = vmatpush.bf16.msra.mxu0 %v760
      %1006 = vmatpush.bf16.msra.mxu0 %v757
      %1007 = vmatpush.bf16.msra.mxu0 %v754
      %1008 = vmatpush.bf16.msra.mxu0 %v751
      %1009 = vmatpush.bf16.msra.mxu0 %v748
      %1010 = vmatpush.bf16.msra.mxu0 %v745
      %1011 = vmatmul.bf16.gmra.mxu0 %v989
      %v1012 = vpop.f32.mrf.mxu0
      %v1013 = vadd.f32 0.0, %v1012
      %v1014 = vpop.f32.mrf.mxu0
      %1015 = vdwg.mxu0
      %1016 = vmatpush.bf16.msra.mxu0 %v767
      %1017 = vmatpush.bf16.msra.mxu0 %v764
      %1018 = vmatpush.bf16.msra.mxu0 %v761
      %1019 = vmatpush.bf16.msra.mxu0 %v758
      %1020 = vmatpush.bf16.msra.mxu0 %v755
      %1021 = vmatpush.bf16.msra.mxu0 %v752
      %1022 = vmatpush.bf16.msra.mxu0 %v749
      %1023 = vmatpush.bf16.msra.mxu0 %v746
      %1024 = vmatmul.bf16.gmra.mxu0 %v989
      %v1025 = vpop.f32.mrf.mxu0
      %v1026 = vadd.f32 0.0, %v1025
      %v1027 = vpop.f32.mrf.mxu0
      %1028 = vdwg.mxu0
      %v1029 = vadd.f32 %v986, %v1000
      %v1030 = vxor.u32 %v1029, 2147483648
      %v1031 = vmul.f32 %v1030, 1.442695
      %v1032 = vpow.pop %v1031
      %v1033 = vadd.f32 %v1032, 1.0
      %v1034 = vrcp.pop %v1033
      %v1035 = vmul.f32 %v1033, %v1034
      %v1036 = vsub.f32 1.0, %v1035
      %v1037 = vmul.f32 %v1034, %v1036
      %v1038 = vadd.f32 %v1034, %v1037
      %vm1039 = vweird.f32 %v1033
      %vm1040 = vweird.f32 %v1034
      %vm1041 = vmor %vm1039, %vm1040
      %v1042 = vsel %vm1041, %v1034, %v1038
      %v1043 = vand.u32 2147483647, %v1033
      %vm1044 = vcmp.eq.f32.partialorder %v1043, 8.507059e+37
      %v1045 = vand.u32 %v1033, 2147483648
      %v1046 = vor.u32 1.1754944e-38, %v1045
      %v1047 = vsel %vm1044, %v1046, %v1042
      %v1048 = vmul.f32 1.0, %v1047
      %v1049 = vadd.f32 %v987, %v1013
      %v1050 = vxor.u32 %v1049, 2147483648
      %v1051 = vmul.f32 %v1050, 1.442695
      %v1052 = vpow.pop %v1051
      %v1053 = vadd.f32 %v1052, 1.0
      %v1054 = vrcp.pop %v1053
      %v1055 = vmul.f32 %v1053, %v1054
      %v1056 = vsub.f32 1.0, %v1055
      %v1057 = vmul.f32 %v1054, %v1056
      %v1058 = vadd.f32 %v1054, %v1057
      %vm1059 = vweird.f32 %v1053
      %vm1060 = vweird.f32 %v1054
      %vm1061 = vmor %vm1059, %vm1060
      %v1062 = vsel %vm1061, %v1054, %v1058
      %v1063 = vand.u32 2147483647, %v1053
      %vm1064 = vcmp.eq.f32.partialorder %v1063, 8.507059e+37
      %v1065 = vand.u32 %v1053, 2147483648
      %v1066 = vor.u32 1.1754944e-38, %v1065
      %v1067 = vsel %vm1064, %v1066, %v1062
      %v1068 = vmul.f32 1.0, %v1067
      %v1069 = vadd.f32 %v1026, %v398
      %v1070 = vmul.f32 %v1048, %v1069
      %v1071 = vadd.f32 %v988, %v1070
      %v1072 = vtanh.pop %v1071
      %v1073 = vsub.f32 1.0, %v1068
      %v1074 = vmul.f32 %v1073, %v1072
      %v1075 = vmul.f32 %v1068, %v976
      %v1076 = vadd.f32 %v1074, %v1075
      // Predicated region
      $region76: #{basic_gru_forward.1} parent=43 // pred_check
        %p1077 = pneg %p291
      $region77: #{basic_gru_forward.1} parent=43 // pred_check_branch
        %1079 = sbr.rel (%p1077) target = $region79
      $region78: #{basic_gru_forward.1} parent=43 // pred_region
        %s1080 = sadd.s32 0, 16
        %s1081 = scalar_lea.vmem [#allocation2], %s1080
        %1082 = vst [vmem:[%s1081] sm:$0xff] %v1076
      $region79: #{basic_gru_forward.1} parent=43 // pred_fallthru
        _
      %s1083 = smul.u32 3, 3
      %s1084 = smul.addr %s1083, 8
      %s1085 = scalar_lea.vmem [#allocation3], %s1084
      %v1086 = vld [vmem:[%s1085] sm:$0xff]
      %v1087 = vld [vmem:[%s1085 + $0x8] sm:$0xff]
      %v1088 = vld [vmem:[%s1085 + $0x10] sm:$0xff]
      %v1089 = vpack.c.bf16 %v1076, %v1076
      %1090 = vmatpush.bf16.msra.mxu0 %v765
      %1091 = vmatpush.bf16.msra.mxu0 %v762
      %1092 = vmatpush.bf16.msra.mxu0 %v759
      %1093 = vmatpush.bf16.msra.mxu0 %v756
      %1094 = vmatpush.bf16.msra.mxu0 %v753
      %1095 = vmatpush.bf16.msra.mxu0 %v750
      %1096 = vmatpush.bf16.msra.mxu0 %v747
      %1097 = vmatpush.bf16.msra.mxu0 %v744
      %1098 = vmatmul.bf16.gmra.mxu0 %v1089
      %v1099 = vpop.f32.mrf.mxu0
      %v1100 = vadd.f32 0.0, %v1099
      %v1101 = vpop.f32.mrf.mxu0
      %1102 = vdwg.mxu0
      %1103 = vmatpush.bf16.msra.mxu0 %v766
      %1104 = vmatpush.bf16.msra.mxu0 %v763
      %1105 = vmatpush.bf16.msra.mxu0 %v760
      %1106 = vmatpush.bf16.msra.mxu0 %v757
      %1107 = vmatpush.bf16.msra.mxu0 %v754
      %1108 = vmatpush.bf16.msra.mxu0 %v751
      %1109 = vmatpush.bf16.msra.mxu0 %v748
      %1110 = vmatpush.bf16.msra.mxu0 %v745
      %1111 = vmatmul.bf16.gmra.mxu0 %v1089
      %v1112 = vpop.f32.mrf.mxu0
      %v1113 = vadd.f32 0.0, %v1112
      %v1114 = vpop.f32.mrf.mxu0
      %1115 = vdwg.mxu0
      %1116 = vmatpush.bf16.msra.mxu0 %v767
      %1117 = vmatpush.bf16.msra.mxu0 %v764
      %1118 = vmatpush.bf16.msra.mxu0 %v761
      %1119 = vmatpush.bf16.msra.mxu0 %v758
      %1120 = vmatpush.bf16.msra.mxu0 %v755
      %1121 = vmatpush.bf16.msra.mxu0 %v752
      %1122 = vmatpush.bf16.msra.mxu0 %v749
      %1123 = vmatpush.bf16.msra.mxu0 %v746
      %1124 = vmatmul.bf16.gmra.mxu0 %v1089
      %v1125 = vpop.f32.mrf.mxu0
      %v1126 = vadd.f32 0.0, %v1125
      %v1127 = vpop.f32.mrf.mxu0
      %1128 = vdwg.mxu0
      %v1129 = vadd.f32 %v1086, %v1100
      %v1130 = vxor.u32 %v1129, 2147483648
      %v1131 = vmul.f32 %v1130, 1.442695
      %v1132 = vpow.pop %v1131
      %v1133 = vadd.f32 %v1132, 1.0
      %v1134 = vrcp.pop %v1133
      %v1135 = vmul.f32 %v1133, %v1134
      %v1136 = vsub.f32 1.0, %v1135
      %v1137 = vmul.f32 %v1134, %v1136
      %v1138 = vadd.f32 %v1134, %v1137
      %vm1139 = vweird.f32 %v1133
      %vm1140 = vweird.f32 %v1134
      %vm1141 = vmor %vm1139, %vm1140
      %v1142 = vsel %vm1141, %v1134, %v1138
      %v1143 = vand.u32 2147483647, %v1133
      %vm1144 = vcmp.eq.f32.partialorder %v1143, 8.507059e+37
      %v1145 = vand.u32 %v1133, 2147483648
      %v1146 = vor.u32 1.1754944e-38, %v1145
      %v1147 = vsel %vm1144, %v1146, %v1142
      %v1148 = vmul.f32 1.0, %v1147
      %v1149 = vadd.f32 %v1087, %v1113
      %v1150 = vxor.u32 %v1149, 2147483648
      %v1151 = vmul.f32 %v1150, 1.442695
      %v1152 = vpow.pop %v1151
      %v1153 = vadd.f32 %v1152, 1.0
      %v1154 = vrcp.pop %v1153
      %v1155 = vmul.f32 %v1153, %v1154
      %v1156 = vsub.f32 1.0, %v1155
      %v1157 = vmul.f32 %v1154, %v1156
      %v1158 = vadd.f32 %v1154, %v1157
      %vm1159 = vweird.f32 %v1153
      %vm1160 = vweird.f32 %v1154
      %vm1161 = vmor %vm1159, %vm1160
      %v1162 = vsel %vm1161, %v1154, %v1158
      %v1163 = vand.u32 2147483647, %v1153
      %vm1164 = vcmp.eq.f32.partialorder %v1163, 8.507059e+37
      %v1165 = vand.u32 %v1153, 2147483648
      %v1166 = vor.u32 1.1754944e-38, %v1165
      %v1167 = vsel %vm1164, %v1166, %v1162
      %v1168 = vmul.f32 1.0, %v1167
      %v1169 = vadd.f32 %v1126, %v398
      %v1170 = vmul.f32 %v1148, %v1169
      %v1171 = vadd.f32 %v1088, %v1170
      %v1172 = vtanh.pop %v1171
      %v1173 = vsub.f32 1.0, %v1168
      %v1174 = vmul.f32 %v1173, %v1172
      %v1175 = vmul.f32 %v1168, %v1076
      %v1176 = vadd.f32 %v1174, %v1175
      // Predicated region
      $region80: #{basic_gru_forward.1} parent=43 // pred_check
        %p1177 = pneg %p291
      $region81: #{basic_gru_forward.1} parent=43 // pred_check_branch
        %1179 = sbr.rel (%p1177) target = $region83
      $region82: #{basic_gru_forward.1} parent=43 // pred_region
        %s1180 = sadd.s32 0, 24
        %s1181 = scalar_lea.vmem [#allocation2], %s1180
        %1182 = vst [vmem:[%s1181] sm:$0xff] %v1176
      $region83: #{basic_gru_forward.1} parent=43 // pred_fallthru
        _
      %s1183 = smul.u32 4, 3
      %s1184 = smul.addr %s1183, 8
      %s1185 = scalar_lea.vmem [#allocation3], %s1184
      %v1186 = vld [vmem:[%s1185] sm:$0xff]
      %v1187 = vld [vmem:[%s1185 + $0x8] sm:$0xff]
      %v1188 = vld [vmem:[%s1185 + $0x10] sm:$0xff]
      %v1189 = vpack.c.bf16 %v1176, %v1176
      %1190 = vmatpush.bf16.msra.mxu0 %v765
      %1191 = vmatpush.bf16.msra.mxu0 %v762
      %1192 = vmatpush.bf16.msra.mxu0 %v759
      %1193 = vmatpush.bf16.msra.mxu0 %v756
      %1194 = vmatpush.bf16.msra.mxu0 %v753
      %1195 = vmatpush.bf16.msra.mxu0 %v750
      %1196 = vmatpush.bf16.msra.mxu0 %v747
      %1197 = vmatpush.bf16.msra.mxu0 %v744
      %1198 = vmatmul.bf16.gmra.mxu0 %v1189
      %v1199 = vpop.f32.mrf.mxu0
      %v1200 = vadd.f32 0.0, %v1199
      %v1201 = vpop.f32.mrf.mxu0
      %1202 = vdwg.mxu0
      %1203 = vmatpush.bf16.msra.mxu0 %v766
      %1204 = vmatpush.bf16.msra.mxu0 %v763
      %1205 = vmatpush.bf16.msra.mxu0 %v760
      %1206 = vmatpush.bf16.msra.mxu0 %v757
      %1207 = vmatpush.bf16.msra.mxu0 %v754
      %1208 = vmatpush.bf16.msra.mxu0 %v751
      %1209 = vmatpush.bf16.msra.mxu0 %v748
      %1210 = vmatpush.bf16.msra.mxu0 %v745
      %1211 = vmatmul.bf16.gmra.mxu0 %v1189
      %v1212 = vpop.f32.mrf.mxu0
      %v1213 = vadd.f32 0.0, %v1212
      %v1214 = vpop.f32.mrf.mxu0
      %1215 = vdwg.mxu0
      %1216 = vmatpush.bf16.msra.mxu0 %v767
      %1217 = vmatpush.bf16.msra.mxu0 %v764
      %1218 = vmatpush.bf16.msra.mxu0 %v761
      %1219 = vmatpush.bf16.msra.mxu0 %v758
      %1220 = vmatpush.bf16.msra.mxu0 %v755
      %1221 = vmatpush.bf16.msra.mxu0 %v752
      %1222 = vmatpush.bf16.msra.mxu0 %v749
      %1223 = vmatpush.bf16.msra.mxu0 %v746
      %1224 = vmatmul.bf16.gmra.mxu0 %v1189
      %v1225 = vpop.f32.mrf.mxu0
      %v1226 = vadd.f32 0.0, %v1225
      %v1227 = vpop.f32.mrf.mxu0
      %1228 = vdwg.mxu0
      %v1229 = vadd.f32 %v1186, %v1200
      %v1230 = vxor.u32 %v1229, 2147483648
      %v1231 = vmul.f32 %v1230, 1.442695
      %v1232 = vpow.pop %v1231
      %v1233 = vadd.f32 %v1232, 1.0
      %v1234 = vrcp.pop %v1233
      %v1235 = vmul.f32 %v1233, %v1234
      %v1236 = vsub.f32 1.0, %v1235
      %v1237 = vmul.f32 %v1234, %v1236
      %v1238 = vadd.f32 %v1234, %v1237
      %vm1239 = vweird.f32 %v1233
      %vm1240 = vweird.f32 %v1234
      %vm1241 = vmor %vm1239, %vm1240
      %v1242 = vsel %vm1241, %v1234, %v1238
      %v1243 = vand.u32 2147483647, %v1233
      %vm1244 = vcmp.eq.f32.partialorder %v1243, 8.507059e+37
      %v1245 = vand.u32 %v1233, 2147483648
      %v1246 = vor.u32 1.1754944e-38, %v1245
      %v1247 = vsel %vm1244, %v1246, %v1242
      %v1248 = vmul.f32 1.0, %v1247
      %v1249 = vadd.f32 %v1187, %v1213
      %v1250 = vxor.u32 %v1249, 2147483648
      %v1251 = vmul.f32 %v1250, 1.442695
      %v1252 = vpow.pop %v1251
      %v1253 = vadd.f32 %v1252, 1.0
      %v1254 = vrcp.pop %v1253
      %v1255 = vmul.f32 %v1253, %v1254
      %v1256 = vsub.f32 1.0, %v1255
      %v1257 = vmul.f32 %v1254, %v1256
      %v1258 = vadd.f32 %v1254, %v1257
      %vm1259 = vweird.f32 %v1253
      %vm1260 = vweird.f32 %v1254
      %vm1261 = vmor %vm1259, %vm1260
      %v1262 = vsel %vm1261, %v1254, %v1258
      %v1263 = vand.u32 2147483647, %v1253
      %vm1264 = vcmp.eq.f32.partialorder %v1263, 8.507059e+37
      %v1265 = vand.u32 %v1253, 2147483648
      %v1266 = vor.u32 1.1754944e-38, %v1265
      %v1267 = vsel %vm1264, %v1266, %v1262
      %v1268 = vmul.f32 1.0, %v1267
      %v1269 = vadd.f32 %v1226, %v398
      %v1270 = vmul.f32 %v1248, %v1269
      %v1271 = vadd.f32 %v1188, %v1270
      %v1272 = vtanh.pop %v1271
      %v1273 = vsub.f32 1.0, %v1268
      %v1274 = vmul.f32 %v1273, %v1272
      %v1275 = vmul.f32 %v1268, %v1176
      %v1276 = vadd.f32 %v1274, %v1275
      // Predicated region
      $region84: #{basic_gru_forward.1} parent=43 // pred_check
        %p1277 = pneg %p291
      $region85: #{basic_gru_forward.1} parent=43 // pred_check_branch
        %1279 = sbr.rel (%p1277) target = $region87
      $region86: #{basic_gru_forward.1} parent=43 // pred_region
        %s1280 = sadd.s32 0, 32
        %s1281 = scalar_lea.vmem [#allocation2], %s1280
        %1282 = vst [vmem:[%s1281] sm:$0xff] %v1276
      $region87: #{basic_gru_forward.1} parent=43 // pred_fallthru
        _
      %s1283 = smul.u32 5, 3
      %s1284 = smul.addr %s1283, 8
      %s1285 = scalar_lea.vmem [#allocation3], %s1284
      %v1286 = vld [vmem:[%s1285] sm:$0xff]
      %v1287 = vld [vmem:[%s1285 + $0x8] sm:$0xff]
      %v1288 = vld [vmem:[%s1285 + $0x10] sm:$0xff]
      %v1289 = vpack.c.bf16 %v1276, %v1276
      %1290 = vmatpush.bf16.msra.mxu0 %v765
      %1291 = vmatpush.bf16.msra.mxu0 %v762
      %1292 = vmatpush.bf16.msra.mxu0 %v759
      %1293 = vmatpush.bf16.msra.mxu0 %v756
      %1294 = vmatpush.bf16.msra.mxu0 %v753
      %1295 = vmatpush.bf16.msra.mxu0 %v750
      %1296 = vmatpush.bf16.msra.mxu0 %v747
      %1297 = vmatpush.bf16.msra.mxu0 %v744
      %1298 = vmatmul.bf16.gmra.mxu0 %v1289
      %v1299 = vpop.f32.mrf.mxu0
      %v1300 = vadd.f32 0.0, %v1299
      %v1301 = vpop.f32.mrf.mxu0
      %1302 = vdwg.mxu0
      %1303 = vmatpush.bf16.msra.mxu0 %v766
      %1304 = vmatpush.bf16.msra.mxu0 %v763
      %1305 = vmatpush.bf16.msra.mxu0 %v760
      %1306 = vmatpush.bf16.msra.mxu0 %v757
      %1307 = vmatpush.bf16.msra.mxu0 %v754
      %1308 = vmatpush.bf16.msra.mxu0 %v751
      %1309 = vmatpush.bf16.msra.mxu0 %v748
      %1310 = vmatpush.bf16.msra.mxu0 %v745
      %1311 = vmatmul.bf16.gmra.mxu0 %v1289
      %v1312 = vpop.f32.mrf.mxu0
      %v1313 = vadd.f32 0.0, %v1312
      %v1314 = vpop.f32.mrf.mxu0
      %1315 = vdwg.mxu0
      %1316 = vmatpush.bf16.msra.mxu0 %v767
      %1317 = vmatpush.bf16.msra.mxu0 %v764
      %1318 = vmatpush.bf16.msra.mxu0 %v761
      %1319 = vmatpush.bf16.msra.mxu0 %v758
      %1320 = vmatpush.bf16.msra.mxu0 %v755
      %1321 = vmatpush.bf16.msra.mxu0 %v752
      %1322 = vmatpush.bf16.msra.mxu0 %v749
      %1323 = vmatpush.bf16.msra.mxu0 %v746
      %1324 = vmatmul.bf16.gmra.mxu0 %v1289
      %v1325 = vpop.f32.mrf.mxu0
      %v1326 = vadd.f32 0.0, %v1325
      %v1327 = vpop.f32.mrf.mxu0
      %1328 = vdwg.mxu0
      %v1329 = vadd.f32 %v1286, %v1300
      %v1330 = vxor.u32 %v1329, 2147483648
      %v1331 = vmul.f32 %v1330, 1.442695
      %v1332 = vpow.pop %v1331
      %v1333 = vadd.f32 %v1332, 1.0
      %v1334 = vrcp.pop %v1333
      %v1335 = vmul.f32 %v1333, %v1334
      %v1336 = vsub.f32 1.0, %v1335
      %v1337 = vmul.f32 %v1334, %v1336
      %v1338 = vadd.f32 %v1334, %v1337
      %vm1339 = vweird.f32 %v1333
      %vm1340 = vweird.f32 %v1334
      %vm1341 = vmor %vm1339, %vm1340
      %v1342 = vsel %vm1341, %v1334, %v1338
      %v1343 = vand.u32 2147483647, %v1333
      %vm1344 = vcmp.eq.f32.partialorder %v1343, 8.507059e+37
      %v1345 = vand.u32 %v1333, 2147483648
      %v1346 = vor.u32 1.1754944e-38, %v1345
      %v1347 = vsel %vm1344, %v1346, %v1342
      %v1348 = vmul.f32 1.0, %v1347
      %v1349 = vadd.f32 %v1287, %v1313
      %v1350 = vxor.u32 %v1349, 2147483648
      %v1351 = vmul.f32 %v1350, 1.442695
      %v1352 = vpow.pop %v1351
      %v1353 = vadd.f32 %v1352, 1.0
      %v1354 = vrcp.pop %v1353
      %v1355 = vmul.f32 %v1353, %v1354
      %v1356 = vsub.f32 1.0, %v1355
      %v1357 = vmul.f32 %v1354, %v1356
      %v1358 = vadd.f32 %v1354, %v1357
      %vm1359 = vweird.f32 %v1353
      %vm1360 = vweird.f32 %v1354
      %vm1361 = vmor %vm1359, %vm1360
      %v1362 = vsel %vm1361, %v1354, %v1358
      %v1363 = vand.u32 2147483647, %v1353
      %vm1364 = vcmp.eq.f32.partialorder %v1363, 8.507059e+37
      %v1365 = vand.u32 %v1353, 2147483648
      %v1366 = vor.u32 1.1754944e-38, %v1365
      %v1367 = vsel %vm1364, %v1366, %v1362
      %v1368 = vmul.f32 1.0, %v1367
      %v1369 = vadd.f32 %v1326, %v398
      %v1370 = vmul.f32 %v1348, %v1369
      %v1371 = vadd.f32 %v1288, %v1370
      %v1372 = vtanh.pop %v1371
      %v1373 = vsub.f32 1.0, %v1368
      %v1374 = vmul.f32 %v1373, %v1372
      %v1375 = vmul.f32 %v1368, %v1276
      %v1376 = vadd.f32 %v1374, %v1375
      // Predicated region
      $region88: #{basic_gru_forward.1} parent=43 // pred_check
        %p1377 = pneg %p291
      $region89: #{basic_gru_forward.1} parent=43 // pred_check_branch
        %1379 = sbr.rel (%p1377) target = $region91
      $region90: #{basic_gru_forward.1} parent=43 // pred_region
        %s1380 = sadd.s32 0, 40
        %s1381 = scalar_lea.vmem [#allocation2], %s1380
        %1382 = vst [vmem:[%s1381] sm:$0xff] %v1376
      $region91: #{basic_gru_forward.1} parent=43 // pred_fallthru
        _
      %s1383 = smul.u32 6, 3
      %s1384 = smul.addr %s1383, 8
      %s1385 = scalar_lea.vmem [#allocation3], %s1384
      %v1386 = vld [vmem:[%s1385] sm:$0xff]
      %v1387 = vld [vmem:[%s1385 + $0x8] sm:$0xff]
      %v1388 = vld [vmem:[%s1385 + $0x10] sm:$0xff]
      %v1389 = vpack.c.bf16 %v1376, %v1376
      %1390 = vmatpush.bf16.msra.mxu0 %v765
      %1391 = vmatpush.bf16.msra.mxu0 %v762
      %1392 = vmatpush.bf16.msra.mxu0 %v759
      %1393 = vmatpush.bf16.msra.mxu0 %v756
      %1394 = vmatpush.bf16.msra.mxu0 %v753
      %1395 = vmatpush.bf16.msra.mxu0 %v750
      %1396 = vmatpush.bf16.msra.mxu0 %v747
      %1397 = vmatpush.bf16.msra.mxu0 %v744
      %1398 = vmatmul.bf16.gmra.mxu0 %v1389
      %v1399 = vpop.f32.mrf.mxu0
      %v1400 = vadd.f32 0.0, %v1399
      %v1401 = vpop.f32.mrf.mxu0
      %1402 = vdwg.mxu0
      %1403 = vmatpush.bf16.msra.mxu0 %v766
      %1404 = vmatpush.bf16.msra.mxu0 %v763
      %1405 = vmatpush.bf16.msra.mxu0 %v760
      %1406 = vmatpush.bf16.msra.mxu0 %v757
      %1407 = vmatpush.bf16.msra.mxu0 %v754
      %1408 = vmatpush.bf16.msra.mxu0 %v751
      %1409 = vmatpush.bf16.msra.mxu0 %v748
      %1410 = vmatpush.bf16.msra.mxu0 %v745
      %1411 = vmatmul.bf16.gmra.mxu0 %v1389
      %v1412 = vpop.f32.mrf.mxu0
      %v1413 = vadd.f32 0.0, %v1412
      %v1414 = vpop.f32.mrf.mxu0
      %1415 = vdwg.mxu0
      %1416 = vmatpush.bf16.msra.mxu0 %v767
      %1417 = vmatpush.bf16.msra.mxu0 %v764
      %1418 = vmatpush.bf16.msra.mxu0 %v761
      %1419 = vmatpush.bf16.msra.mxu0 %v758
      %1420 = vmatpush.bf16.msra.mxu0 %v755
      %1421 = vmatpush.bf16.msra.mxu0 %v752
      %1422 = vmatpush.bf16.msra.mxu0 %v749
      %1423 = vmatpush.bf16.msra.mxu0 %v746
      %1424 = vmatmul.bf16.gmra.mxu0 %v1389
      %v1425 = vpop.f32.mrf.mxu0
      %v1426 = vadd.f32 0.0, %v1425
      %v1427 = vpop.f32.mrf.mxu0
      %1428 = vdwg.mxu0
      %v1429 = vadd.f32 %v1386, %v1400
      %v1430 = vxor.u32 %v1429, 2147483648
      %v1431 = vmul.f32 %v1430, 1.442695
      %v1432 = vpow.pop %v1431
      %v1433 = vadd.f32 %v1432, 1.0
      %v1434 = vrcp.pop %v1433
      %v1435 = vmul.f32 %v1433, %v1434
      %v1436 = vsub.f32 1.0, %v1435
      %v1437 = vmul.f32 %v1434, %v1436
      %v1438 = vadd.f32 %v1434, %v1437
      %vm1439 = vweird.f32 %v1433
      %vm1440 = vweird.f32 %v1434
      %vm1441 = vmor %vm1439, %vm1440
      %v1442 = vsel %vm1441, %v1434, %v1438
      %v1443 = vand.u32 2147483647, %v1433
      %vm1444 = vcmp.eq.f32.partialorder %v1443, 8.507059e+37
      %v1445 = vand.u32 %v1433, 2147483648
      %v1446 = vor.u32 1.1754944e-38, %v1445
      %v1447 = vsel %vm1444, %v1446, %v1442
      %v1448 = vmul.f32 1.0, %v1447
      %v1449 = vadd.f32 %v1387, %v1413
      %v1450 = vxor.u32 %v1449, 2147483648
      %v1451 = vmul.f32 %v1450, 1.442695
      %v1452 = vpow.pop %v1451
      %v1453 = vadd.f32 %v1452, 1.0
      %v1454 = vrcp.pop %v1453
      %v1455 = vmul.f32 %v1453, %v1454
      %v1456 = vsub.f32 1.0, %v1455
      %v1457 = vmul.f32 %v1454, %v1456
      %v1458 = vadd.f32 %v1454, %v1457
      %vm1459 = vweird.f32 %v1453
      %vm1460 = vweird.f32 %v1454
      %vm1461 = vmor %vm1459, %vm1460
      %v1462 = vsel %vm1461, %v1454, %v1458
      %v1463 = vand.u32 2147483647, %v1453
      %vm1464 = vcmp.eq.f32.partialorder %v1463, 8.507059e+37
      %v1465 = vand.u32 %v1453, 2147483648
      %v1466 = vor.u32 1.1754944e-38, %v1465
      %v1467 = vsel %vm1464, %v1466, %v1462
      %v1468 = vmul.f32 1.0, %v1467
      %v1469 = vadd.f32 %v1426, %v398
      %v1470 = vmul.f32 %v1448, %v1469
      %v1471 = vadd.f32 %v1388, %v1470
      %v1472 = vtanh.pop %v1471
      %v1473 = vsub.f32 1.0, %v1468
      %v1474 = vmul.f32 %v1473, %v1472
      %v1475 = vmul.f32 %v1468, %v1376
      %v1476 = vadd.f32 %v1474, %v1475
      // Predicated region
      $region92: #{basic_gru_forward.1} parent=43 // pred_check
        %p1477 = pneg %p291
      $region93: #{basic_gru_forward.1} parent=43 // pred_check_branch
        %1479 = sbr.rel (%p1477) target = $region95
      $region94: #{basic_gru_forward.1} parent=43 // pred_region
        %s1480 = sadd.s32 0, 48
        %s1481 = scalar_lea.vmem [#allocation2], %s1480
        %1482 = vst [vmem:[%s1481] sm:$0xff] %v1476
      $region95: #{basic_gru_forward.1} parent=43 // pred_fallthru
        _
      %s1483 = smul.u32 7, 3
      %s1484 = smul.addr %s1483, 8
      %s1485 = scalar_lea.vmem [#allocation3], %s1484
      %v1486 = vld [vmem:[%s1485] sm:$0xff]
      %v1487 = vld [vmem:[%s1485 + $0x8] sm:$0xff]
      %v1488 = vld [vmem:[%s1485 + $0x10] sm:$0xff]
      %v1489 = vpack.c.bf16 %v1476, %v1476
      %1490 = vmatpush.bf16.msra.mxu0 %v765
      %1491 = vmatpush.bf16.msra.mxu0 %v762
      %1492 = vmatpush.bf16.msra.mxu0 %v759
      %1493 = vmatpush.bf16.msra.mxu0 %v756
      %1494 = vmatpush.bf16.msra.mxu0 %v753
      %1495 = vmatpush.bf16.msra.mxu0 %v750
      %1496 = vmatpush.bf16.msra.mxu0 %v747
      %1497 = vmatpush.bf16.msra.mxu0 %v744
      %1498 = vmatmul.bf16.gmra.mxu0 %v1489
      %v1499 = vpop.f32.mrf.mxu0
      %v1500 = vadd.f32 0.0, %v1499
      %v1501 = vpop.f32.mrf.mxu0
      %1502 = vdwg.mxu0
      %1503 = vmatpush.bf16.msra.mxu0 %v766
      %1504 = vmatpush.bf16.msra.mxu0 %v763
      %1505 = vmatpush.bf16.msra.mxu0 %v760
      %1506 = vmatpush.bf16.msra.mxu0 %v757
      %1507 = vmatpush.bf16.msra.mxu0 %v754
      %1508 = vmatpush.bf16.msra.mxu0 %v751
      %1509 = vmatpush.bf16.msra.mxu0 %v748
      %1510 = vmatpush.bf16.msra.mxu0 %v745
      %1511 = vmatmul.bf16.gmra.mxu0 %v1489
      %v1512 = vpop.f32.mrf.mxu0
      %v1513 = vadd.f32 0.0, %v1512
      %v1514 = vpop.f32.mrf.mxu0
      %1515 = vdwg.mxu0
      %1516 = vmatpush.bf16.msra.mxu0 %v767
      %1517 = vmatpush.bf16.msra.mxu0 %v764
      %1518 = vmatpush.bf16.msra.mxu0 %v761
      %1519 = vmatpush.bf16.msra.mxu0 %v758
      %1520 = vmatpush.bf16.msra.mxu0 %v755
      %1521 = vmatpush.bf16.msra.mxu0 %v752
      %1522 = vmatpush.bf16.msra.mxu0 %v749
      %1523 = vmatpush.bf16.msra.mxu0 %v746
      %1524 = vmatmul.bf16.gmra.mxu0 %v1489
      %v1525 = vpop.f32.mrf.mxu0
      %v1526 = vadd.f32 0.0, %v1525
      %v1527 = vpop.f32.mrf.mxu0
      %1528 = vdwg.mxu0
      %v1529 = vadd.f32 %v1486, %v1500
      %v1530 = vxor.u32 %v1529, 2147483648
      %v1531 = vmul.f32 %v1530, 1.442695
      %v1532 = vpow.pop %v1531
      %v1533 = vadd.f32 %v1532, 1.0
      %v1534 = vrcp.pop %v1533
      %v1535 = vmul.f32 %v1533, %v1534
      %v1536 = vsub.f32 1.0, %v1535
      %v1537 = vmul.f32 %v1534, %v1536
      %v1538 = vadd.f32 %v1534, %v1537
      %vm1539 = vweird.f32 %v1533
      %vm1540 = vweird.f32 %v1534
      %vm1541 = vmor %vm1539, %vm1540
      %v1542 = vsel %vm1541, %v1534, %v1538
      %v1543 = vand.u32 2147483647, %v1533
      %vm1544 = vcmp.eq.f32.partialorder %v1543, 8.507059e+37
      %v1545 = vand.u32 %v1533, 2147483648
      %v1546 = vor.u32 1.1754944e-38, %v1545
      %v1547 = vsel %vm1544, %v1546, %v1542
      %v1548 = vmul.f32 1.0, %v1547
      %v1549 = vadd.f32 %v1487, %v1513
      %v1550 = vxor.u32 %v1549, 2147483648
      %v1551 = vmul.f32 %v1550, 1.442695
      %v1552 = vpow.pop %v1551
      %v1553 = vadd.f32 %v1552, 1.0
      %v1554 = vrcp.pop %v1553
      %v1555 = vmul.f32 %v1553, %v1554
      %v1556 = vsub.f32 1.0, %v1555
      %v1557 = vmul.f32 %v1554, %v1556
      %v1558 = vadd.f32 %v1554, %v1557
      %vm1559 = vweird.f32 %v1553
      %vm1560 = vweird.f32 %v1554
      %vm1561 = vmor %vm1559, %vm1560
      %v1562 = vsel %vm1561, %v1554, %v1558
      %v1563 = vand.u32 2147483647, %v1553
      %vm1564 = vcmp.eq.f32.partialorder %v1563, 8.507059e+37
      %v1565 = vand.u32 %v1553, 2147483648
      %v1566 = vor.u32 1.1754944e-38, %v1565
      %v1567 = vsel %vm1564, %v1566, %v1562
      %v1568 = vmul.f32 1.0, %v1567
      %v1569 = vadd.f32 %v1526, %v398
      %v1570 = vmul.f32 %v1548, %v1569
      %v1571 = vadd.f32 %v1488, %v1570
      %v1572 = vtanh.pop %v1571
      %v1573 = vsub.f32 1.0, %v1568
      %v1574 = vmul.f32 %v1573, %v1572
      %v1575 = vmul.f32 %v1568, %v1476
      %v1576 = vadd.f32 %v1574, %v1575
      // Predicated region
      $region96: #{basic_gru_forward.1} parent=43 // pred_check
        %p1577 = pneg %p291
      $region97: #{basic_gru_forward.1} parent=43 // pred_check_branch
        %1579 = sbr.rel (%p1577) target = $region99
      $region98: #{basic_gru_forward.1} parent=43 // pred_region
        %s1580 = sadd.s32 0, 56
        %s1581 = scalar_lea.vmem [#allocation2], %s1580
        %1582 = vst [vmem:[%s1581] sm:$0xff] %v1576
      $region99: #{basic_gru_forward.1} parent=43 // pred_fallthru
        _
      %s1583 = smul.u32 %s18, 8
      %s1584 = scalar_lea.vmem [#allocation4], %s1583
      %1585 = vst [vmem:[%s1584] sm:$0xff] %v1576
      // Predicated region
      $region100: #{basic_gru_forward.1} parent=43 // pred_check
        %p1586 = pneg %p290
      $region101: #{basic_gru_forward.1} parent=43 // pred_check_branch
        %1588 = sbr.rel (%p1586) target = $region103
      $region102: #{basic_gru_forward.1} parent=43 // pred_region
        %v1589 = vld [vmem:[#allocation4] sm:$0xff]
        %v1590 = vld [vmem:[#allocation4 + $0x8] sm:$0xff]
        %v1591 = vpack.c.bf16 %v1590, %v1589
        %v1592 = vld [vmem:[%s5] sm:$0xf]
        %v1593 = vld [vmem:[%s5 + $0x4] sm:$0xf]
        %v1594 = vld [vmem:[%s5 + $0x8] sm:$0xf]
        %v1595 = vld [vmem:[%s5 + $0xc] sm:$0xf]
        %v1596 = vld [vmem:[%s5 + $0x10] sm:$0xf]
        %v1597 = vld [vmem:[%s5 + $0x14] sm:$0xf]
        %v1598 = vld [vmem:[%s5 + $0x18] sm:$0xf]
        %v1599 = vld [vmem:[%s5 + $0x1c] sm:$0xf]
        %v1600 = vld [vmem:[%s5 + $0x20] sm:$0xf]
        %v1601 = vld [vmem:[%s5 + $0x24] sm:$0xf]
        %v1602 = vld [vmem:[%s5 + $0x28] sm:$0xf]
        %v1603 = vld [vmem:[%s5 + $0x2c] sm:$0xf]
        %v1604 = vld [vmem:[%s5 + $0x30] sm:$0xf]
        %v1605 = vld [vmem:[%s5 + $0x34] sm:$0xf]
        %v1606 = vld [vmem:[%s5 + $0x38] sm:$0xf]
        %v1607 = vld [vmem:[%s5 + $0x3c] sm:$0xf]
        %v1608 = vld [vmem:[%s6] sm:$0x1]
        %v1610 = vperm.slane %v1608, 0
        %v1628 = vunpack.c.l.b16 %v1592
        %v1629 = vunpack.c.l.b16 %v1593
        %v1630 = vunpack.c.l.b16 %v1594
        %v1631 = vunpack.c.l.b16 %v1595
        %v1632 = vunpack.c.l.b16 %v1596
        %v1633 = vunpack.c.l.b16 %v1597
        %v1634 = vunpack.c.l.b16 %v1598
        %v1635 = vunpack.c.l.b16 %v1599
        %v1636 = vunpack.c.l.b16 %v1600
        %v1637 = vunpack.c.l.b16 %v1601
        %v1638 = vunpack.c.l.b16 %v1602
        %v1639 = vunpack.c.l.b16 %v1603
        %v1640 = vunpack.c.l.b16 %v1604
        %v1641 = vunpack.c.l.b16 %v1605
        %v1642 = vunpack.c.l.b16 %v1606
        %v1643 = vunpack.c.l.b16 %v1607
        %v1644 = vpack.c.b16 %v1629, %v1628
        %v1645 = vpack.c.b16 %v1631, %v1630
        %v1646 = vpack.c.b16 %v1633, %v1632
        %v1647 = vpack.c.b16 %v1635, %v1634
        %v1648 = vpack.c.b16 %v1637, %v1636
        %v1649 = vpack.c.b16 %v1639, %v1638
        %v1650 = vpack.c.b16 %v1641, %v1640
        %v1651 = vpack.c.b16 %v1643, %v1642
        %1660 = vmatpush.bf16.msra.mxu0 %v1651
        %1661 = vmatpush.bf16.msra.mxu0 %v1650
        %1662 = vmatpush.bf16.msra.mxu0 %v1649
        %1663 = vmatpush.bf16.msra.mxu0 %v1648
        %1664 = vmatpush.bf16.msra.mxu0 %v1647
        %1665 = vmatpush.bf16.msra.mxu0 %v1646
        %1666 = vmatpush.bf16.msra.mxu0 %v1645
        %1667 = vmatpush.bf16.msra.mxu0 %v1644
        %1668 = vmatmul.bf16.gmra.mxu0 %v1591
        %v1669 = vpop.f32.mrf.mxu0
        %v1670 = vadd.f32 %v1610, %v1669
        %v1671 = vpop.f32.mrf.mxu0
        %v1672 = vadd.f32 %v1610, %v1671
        %1673 = vdwg.mxu0
        %1674 = vst [vmem:[%s7] sm:$0xff] %v1670
        %1675 = vst [vmem:[%s7 + $0x8] sm:$0xff] %v1672
      $region103: #{basic_gru_forward.1} parent=43 // pred_fallthru
        _
      // Predicated region
      $region104: #{basic_gru_forward.1} parent=43 // pred_check
        %p1676 = pneg %p177
      $region105: #{basic_gru_forward.1} parent=43 // pred_check_branch
        %1678 = sbr.rel (%p1676) target = $region107
      $region106: #{basic_gru_forward.1} parent=43 // pred_region
        _
      $region107: #{basic_gru_forward.1} parent=43 // pred_fallthru
        _
      // Predicated region
      $region108: #{basic_gru_forward.1} parent=43 // pred_check
        %p1679 = pneg %p177
      $region109: #{basic_gru_forward.1} parent=43 // pred_check_branch
        %1681 = sbr.rel (%p1679) target = $region111
      $region110: #{basic_gru_forward.1} parent=43 // pred_region
        _
      $region111: #{basic_gru_forward.1} parent=43 // pred_fallthru
        _
    $region44: #{basic_gru_forward.1} parent=5 // pred_fallthru
      _
    %p1682 = scmp.le.s32.totalorder 2, %s13
    // Predicated region
    $region112: #{basic_gru_forward.1} parent=5 // pred_check
      %p1683 = pneg %p1682
    $region113: #{basic_gru_forward.1} parent=5 // pred_check_branch
      %1685 = sbr.rel (%p1683) target = $region115
    $region114: #{basic_gru_forward.1} parent=5 // pred_region
      %s1686 = ssub.s32 %s13, 2
    $region115: #{basic_gru_forward.1} parent=5 // pred_fallthru
      _
  $region6: #{basic_gru_forward.1} parent=0 // loop_footer
    %s17 = sadd.s32 1, %s13
  $region7: #{basic_gru_forward.1} parent=0 // loop_footer_branch
    %12 = sbr.rel target = $region3
  $region8: #{basic_gru_forward.1} parent=0 // loop_exit
    _
  %1687 = vsyncmov [#allocation5]
  %s1688 = vpop.sfrf %1687
  %p1689 = scmp.eq.s32.totalorder %s1688, 0
  %p1690 = pneg %p1689
  %1692 = shalt.err (%p1690)

</llo_original>
